<compile_context>
chip_gen: v7x
topology: tpu7x:2x2x1
jax: 0.10.0
libtpu: 0.0.40
codegen_flags: <defaults>
</compile_context>

<pallas_src>
import math
from functools import partial

import jax
import jax.numpy as jnp
from jax.experimental import pallas as pl
from jax.experimental.pallas import tpu as pltpu

HEADS = 4


def _round_up(n, m):
    return ((n + m - 1) // m) * m


# ----------------------------------------------------------------- kernel side

def _cmfa_kernel(x_ref, w1_ref, w2_ref, w3_ref, w4_ref, w5_ref, b_ref,
                 mm_ref, mn_ref, o_ref, *, hid_dim, heads):
    f32 = jnp.float32
    H = hid_dim
    Dh = H // heads
    G = 2 * heads                 # head-groups across the two attentions
    E2P = w1_ref.shape[1]         # 128-aligned width of the [V|T] activation slab
    W6 = 6 * H

    x = x_ref[...]                                               # (S, din_pad)

    # ---- stage 1: [i_|t_] = relu([i|t] @ blockdiag(fi1, ft1) + b1)     (S, E2P)
    it = jnp.dot(x, w1_ref[...], preferred_element_type=f32) + b_ref[0:1, 0:E2P]
    it = jnp.maximum(it, 0.0)

    # ---- stage 2: six conv projections [v1|k1|q1|v2|k2|q2]             (S, 6H)
    p2 = jnp.dot(it, w2_ref[...], preferred_element_type=f32) + b_ref[1:2, 0:W6]
    p2 = jnp.maximum(p2, 0.0)

    # ---- stage 3: both MHA in-projections, lane-aligned output layout:
    #      cols [0:E2P] = q (qp_V|qp_T|0), [E2P:2E2P] = k, [2E2P:3E2P] = v
    p3 = jnp.dot(p2, w3_ref[...], preferred_element_type=f32) + b_ref[2:3, :]

    scale = 1.0 / math.sqrt(Dh)
    q = p3[:, 0:E2P] * scale                                     # aligned free views
    k = p3[:, E2P:2 * E2P]
    v = p3[:, 2 * E2P:3 * E2P]

    # ---- attention: all 2*heads head-groups of BOTH MHAs with block-diag masks.
    # scores of every group in ONE matmul:
    #   m_mat[g*Dh+d, g*S+s] = k[s, g*Dh+d], zero off the group diagonal
    k_t = k.T                                                    # (E2P, S)
    m_mat = jnp.concatenate([k_t] * G, axis=1) * mm_ref[...]     # (E2P, G*S)
    scores = jnp.dot(q, m_mat, preferred_element_type=f32)       # (S, G*S)

    # shared per-row max is an exact shift for every group's softmax
    scores = scores - jnp.max(scores, axis=-1, keepdims=True)
    exps = jnp.exp(scores)

    # ONE matmul gives the un-normalized PV product AND the per-group denominators
    n_mat = jnp.concatenate([v] * G, axis=0) * mn_ref[...]       # (G*S, E2P)
    rhs = jnp.concatenate([n_mat, mn_ref[...]], axis=1)          # (G*S, 2*E2P)
    pv = jnp.dot(exps, rhs, preferred_element_type=f32)          # (S, 2*E2P)
    denom = jnp.maximum(pv[:, E2P:2 * E2P], 1e-30)               # underflow guard
    attn = pv[:, 0:E2P] * pl.reciprocal(denom, approx=True)      # (S, E2P)

    # ---- stage 4: both out-projections (block-diag) + residual
    vt = jnp.dot(attn, w4_ref[...], preferred_element_type=f32) + b_ref[3:4, 0:E2P] + it

    # ---- stage 5: fi2/ft2 block-diag; lane-dense full-tile store
    out = jnp.dot(vt, w5_ref[...], preferred_element_type=f32) + b_ref[4:5, 0:E2P]
    o_ref[...] = out


# ------------------------------------------------------------ host-side packing

def _blockdiag(a, b):
    ra, ca = a.shape
    rb, cb = b.shape
    out = jnp.zeros((ra + rb, ca + cb), a.dtype)
    out = out.at[:ra, :ca].set(a)
    out = out.at[ra:, ca:].set(b)
    return out


def _pad_to(a, rows, cols):
    return jnp.pad(a, ((0, rows - a.shape[0]), (0, cols - a.shape[1])))


def pack_cmfa_params(p, img_dim, tab_dim, hid_dim, seq_len, heads=HEADS,
                     dtype=jnp.float32):
    """Pack the 28 parameter arrays into padded, lane-aligned slabs + static masks.

    Call ONCE at weight-load time and reuse the result across forward calls.
    NOTE: assumes the MHA in-proj weight is column-packed (H, 3H) [Wq|Wk|Wv] applied
    as x @ W; transpose real PyTorch in_proj_weight ((3E,E), applied as x @ W.T)
    before calling this when importing checkpoints.
    """
    H = hid_dim
    E2 = 2 * H
    E2P = _round_up(E2, 128)      # lane-aligned [V|T] width
    W6 = 6 * H
    WID = 3 * E2P                 # stage-3 output width ([q|k|v] slots)
    din = img_dim + tab_dim
    din_pad = _round_up(din, 128) # lane-dense input
    Dh = H // heads
    G = 2 * heads

    # stage 1: fi1 / ft1
    w1 = _pad_to(_blockdiag(p["fi1_w"], p["ft1_w"]), din_pad, E2P)

    # stage 2: six conv projections, output [v1|k1|q1|v2|k2|q2]
    wi = jnp.concatenate([p["ci1_w"], p["ci2_w"], p["ci3_w"]], axis=1)
    wt = jnp.concatenate([p["ct1_w"], p["ct2_w"], p["ct3_w"]], axis=1)
    w2 = _pad_to(_blockdiag(wi, wt), E2P, W6)

    # stage 3: both MHA in-projections, output slots q@0, k@E2P, v@2*E2P
    aV, aT = p["aV_in_w"], p["aT_in_w"]          # (H, 3H) packed [Wq|Wk|Wv]

    def rblk(i):
        return slice(i * H, (i + 1) * H)

    w3 = jnp.zeros((W6, WID), jnp.float32)
    w3 = w3.at[rblk(5), 0:H].set(aV[:, 0:H])                         # qp_V = q2 @ Wq_V
    w3 = w3.at[rblk(2), H:2 * H].set(aT[:, 0:H])                     # qp_T = q1 @ Wq_T
    w3 = w3.at[rblk(1), E2P:E2P + H].set(aV[:, H:2 * H])             # kp_V = k1 @ Wk_V
    w3 = w3.at[rblk(4), E2P + H:E2P + 2 * H].set(aT[:, H:2 * H])     # kp_T = k2 @ Wk_T
    w3 = w3.at[rblk(0), 2 * E2P:2 * E2P + H].set(aV[:, 2 * H:3 * H])  # vp_V = v1 @ Wv_V
    w3 = w3.at[rblk(3), 2 * E2P + H:2 * E2P + 2 * H].set(aT[:, 2 * H:3 * H])  # vp_T

    # stage 4/5: out-projections and fi2/ft2
    w4 = _pad_to(_blockdiag(p["aV_out_w"], p["aT_out_w"]), E2P, E2P)
    w5 = _pad_to(_blockdiag(p["fi2_w"], p["ft2_w"]), E2P, E2P)

    # one bias slab: row r = stage r+1 (8 rows for sublane alignment)
    b = jnp.zeros((8, WID), jnp.float32)
    b = b.at[0, 0:E2].set(jnp.concatenate([p["fi1_b"], p["ft1_b"]], axis=1)[0])
    b = b.at[1, 0:W6].set(jnp.concatenate(
        [p["ci1_b"], p["ci2_b"], p["ci3_b"],
         p["ct1_b"], p["ct2_b"], p["ct3_b"]], axis=1)[0])
    bV, bT = p["aV_in_b"], p["aT_in_b"]
    b = b.at[2, 0:H].set(bV[0, 0:H]).at[2, H:2 * H].set(bT[0, 0:H])
    b = b.at[2, E2P:E2P + H].set(bV[0, H:2 * H])
    b = b.at[2, E2P + H:E2P + 2 * H].set(bT[0, H:2 * H])
    b = b.at[2, 2 * E2P:2 * E2P + H].set(bV[0, 2 * H:3 * H])
    b = b.at[2, 2 * E2P + H:2 * E2P + 2 * H].set(bT[0, 2 * H:3 * H])
    b = b.at[3, 0:E2].set(jnp.concatenate([p["aV_out_b"], p["aT_out_b"]], axis=1)[0])
    b = b.at[4, 0:E2].set(jnp.concatenate([p["fi2_b"], p["ft2_b"]], axis=1)[0])

    # static block-diagonal head-group masks (no cross-head / cross-MHA mixing)
    GS = G * seq_len
    mask_m = (jnp.arange(E2P)[:, None] // Dh ==
              jnp.arange(GS)[None, :] // seq_len).astype(jnp.float32)   # (E2P, G*S)
    mask_n = (jnp.arange(GS)[:, None] // seq_len ==
              jnp.arange(E2P)[None, :] // Dh).astype(jnp.float32)       # (G*S, E2P)

    return {
        "w1": w1.astype(dtype), "w2": w2.astype(dtype), "w3": w3.astype(dtype),
        "w4": w4.astype(dtype), "w5": w5.astype(dtype), "bias": b.astype(dtype),
        "mask_m": mask_m, "mask_n": mask_n,
    }


@partial(jax.jit, static_argnames=("hid_dim", "heads"))
def cmfa_forward(i, t, packed, *, hid_dim, heads=HEADS):
    """Fused CMFA forward.  i/t: (S, D) or (B, S, D);  packed: pack_cmfa_params()."""
    squeeze = i.ndim == 2
    if squeeze:
        i, t = i[None], t[None]
    B, S, img_dim = i.shape
    tab_dim = t.shape[-1]

    w1, w2, w3 = packed["w1"], packed["w2"], packed["w3"]
    w4, w5, bias = packed["w4"], packed["w5"], packed["bias"]
    mask_m, mask_n = packed["mask_m"], packed["mask_n"]
    din_pad, E2P = w1.shape

    # pack + zero-pad the two modalities into one lane-dense operand (B, S, din_pad)
    x = jnp.concatenate([i, t], axis=-1).astype(jnp.float32)
    x = jnp.pad(x, ((0, 0), (0, 0), (0, din_pad - (img_dim + tab_dim))))

    kernel = partial(_cmfa_kernel, hid_dim=hid_dim, heads=heads)
    const2 = lambda b: (0, 0)     # weights/masks resident in VMEM across the grid

    W6 = 6 * hid_dim
    G = 2 * heads
    GS = G * S
    flops = 2 * B * S * (din_pad * E2P + E2P * W6 + W6 * 3 * E2P
                         + E2P * GS + GS * 2 * E2P + 2 * E2P * E2P)
    bytes_accessed = int(
        (x.size + B * S * E2P) * 4
        + sum(a.size * a.dtype.itemsize
              for a in (w1, w2, w3, w4, w5, bias, mask_m, mask_n)))
    cost = pl.CostEstimate(flops=flops, transcendentals=B * S * GS,
                           bytes_accessed=bytes_accessed)

    out = pl.pallas_call(
        kernel,
        out_shape=jax.ShapeDtypeStruct((B, S, E2P), jnp.float32),
        grid=(B,),
        in_specs=[
            pl.BlockSpec((None, S, din_pad), lambda b: (b, 0, 0)),
            pl.BlockSpec(w1.shape, const2),
            pl.BlockSpec(w2.shape, const2),
            pl.BlockSpec(w3.shape, const2),
            pl.BlockSpec(w4.shape, const2),
            pl.BlockSpec(w5.shape, const2),
            pl.BlockSpec(bias.shape, const2),
            pl.BlockSpec(mask_m.shape, const2),
            pl.BlockSpec(mask_n.shape, const2),
        ],
        out_specs=pl.BlockSpec((None, S, E2P), lambda b: (b, 0, 0)),
        compiler_params=pltpu.CompilerParams(
            dimension_semantics=("parallel",)),   # batch shards across TCs on v7x
        cost_estimate=cost,
    )(x, w1, w2, w3, w4, w5, bias, mask_m, mask_n)

    out = out[..., : 2 * hid_dim]                 # drop lane padding
    return out[0] if squeeze else out


# ----------------------------------------------------------- pure-JAX reference

def _ref_linear(x, w, b):
    return x @ w + b


def _ref_mha(q, k, v, in_w, in_b, out_w, out_b, heads):
    E = q.shape[-1]
    Dh = E // heads
    qp = q @ in_w[:, 0 * E:1 * E] + in_b[:, 0 * E:1 * E]
    kp = k @ in_w[:, 1 * E:2 * E] + in_b[:, 1 * E:2 * E]
    vp = v @ in_w[:, 2 * E:3 * E] + in_b[:, 2 * E:3 * E]
    scale = 1.0 / math.sqrt(Dh)
    outs = []
    for h in range(heads):
        sl = slice(h * Dh, (h + 1) * Dh)
        s = (qp[:, sl] @ kp[:, sl].T) * scale
        p = jax.nn.softmax(s, axis=-1)
        outs.append(p @ vp[:, sl])
    return jnp.concatenate(outs, axis=-1) @ out_w + out_b


def cmfa_ref(i, t, p):
    i_ = jax.nn.relu(_ref_linear(i, p["fi1_w"], p["fi1_b"]))
    t_ = jax.nn.relu(_ref_linear(t, p["ft1_w"], p["ft1_b"]))
    v1 = jax.nn.relu(_ref_linear(i_, p["ci1_w"], p["ci1_b"]))
    k1 = jax.nn.relu(_ref_linear(i_, p["ci2_w"], p["ci2_b"]))
    q1 = jax.nn.relu(_ref_linear(i_, p["ci3_w"], p["ci3_b"]))
    v2 = jax.nn.relu(_ref_linear(t_, p["ct1_w"], p["ct1_b"]))
    k2 = jax.nn.relu(_ref_linear(t_, p["ct2_w"], p["ct2_b"]))
    q2 = jax.nn.relu(_ref_linear(t_, p["ct3_w"], p["ct3_b"]))
    V_ = _ref_mha(q2, k1, v1, p["aV_in_w"], p["aV_in_b"],
                  p["aV_out_w"], p["aV_out_b"], HEADS) + i_
    T_ = _ref_mha(q1, k2, v2, p["aT_in_w"], p["aT_in_b"],
                  p["aT_out_w"], p["aT_out_b"], HEADS) + t_
    V_ = _ref_linear(V_, p["fi2_w"], p["fi2_b"])
    T_ = _ref_linear(T_, p["ft2_w"], p["ft2_b"])
    return jnp.concatenate([V_, T_], axis=1)


# --------------------------------------------------------------------- main

def make_params(key, img_dim, tab_dim, hid_dim):
    """Deterministic synthetic parameters (shapes match the nn.Module)."""
    params = {}

    def w(k, shape, scale=0.1):
        return (scale * jax.random.normal(k, shape)).astype(jnp.float32)

    keys = iter(jax.random.split(key, 64))
    params["fi1_w"] = w(next(keys), (img_dim, hid_dim)); params["fi1_b"] = w(next(keys), (1, hid_dim))
    params["ft1_w"] = w(next(keys), (tab_dim, hid_dim)); params["ft1_b"] = w(next(keys), (1, hid_dim))
    params["fi2_w"] = w(next(keys), (hid_dim, hid_dim)); params["fi2_b"] = w(next(keys), (1, hid_dim))
    params["ft2_w"] = w(next(keys), (hid_dim, hid_dim)); params["ft2_b"] = w(next(keys), (1, hid_dim))
    for name in ["ci1", "ci2", "ci3", "ct1", "ct2", "ct3"]:
        params[name + "_w"] = w(next(keys), (hid_dim, hid_dim))
        params[name + "_b"] = w(next(keys), (1, hid_dim))
    for name in ["aV", "aT"]:
        params[name + "_in_w"] = w(next(keys), (hid_dim, 3 * hid_dim))
        params[name + "_in_b"] = w(next(keys), (1, 3 * hid_dim))
        params[name + "_out_w"] = w(next(keys), (hid_dim, hid_dim))
        params[name + "_out_b"] = w(next(keys), (1, hid_dim))
    return params


if __name__ == "__main__":
    BATCH, S, IMG_DIM, TAB_DIM, HID_DIM = 4, 8, 16, 12, 32

    key = jax.random.PRNGKey(0)
    k_i, k_t, k_p = jax.random.split(key, 3)
    i = jax.random.normal(k_i, (BATCH, S, IMG_DIM), dtype=jnp.float32)
    t = jax.random.normal(k_t, (BATCH, S, TAB_DIM), dtype=jnp.float32)
    params = make_params(k_p, IMG_DIM, TAB_DIM, HID_DIM)

    # pack weights ONCE (weight-load time); reuse across calls
    packed = pack_cmfa_params(params, IMG_DIM, TAB_DIM, HID_DIM, seq_len=S)

    # batched call: one pallas_call, grid over batch, weights resident in VMEM
    out = jax.block_until_ready(cmfa_forward(i, t, packed, hid_dim=HID_DIM))
    assert out.shape == (BATCH, S, 2 * HID_DIM), out.shape

    ref = jnp.stack([cmfa_ref(i[b], t[b], params) for b in range(BATCH)])
    max_err = float(jnp.max(jnp.abs(out - ref)))
    assert jnp.allclose(out, ref, rtol=1e-3, atol=1e-3), max_err

    # unbatched (2-D) interface, exactly as the PyTorch module's forward
    out1 = jax.block_until_ready(cmfa_forward(i[0], t[0], packed, hid_dim=HID_DIM))
    assert jnp.allclose(out1, ref[0], rtol=1e-3, atol=1e-3)

    # TODO(synk): dropout (p=0.2) inside MultiheadAttention is inference-mode
    # identity here; training-mode stochastic dropout is not implemented.
    print("KERNEL_OK")
</pallas_src>

<mosaic_0001>
module attributes {stable_mosaic.version = 11 : i64} {
  func.func @_cmfa_kernel(%arg0: i32, %arg1: memref<1x8x128xf32, #tpu.memory_space<vmem>>, %arg2: memref<128x128xf32, #tpu.memory_space<vmem>>, %arg3: memref<128x192xf32, #tpu.memory_space<vmem>>, %arg4: memref<192x384xf32, #tpu.memory_space<vmem>>, %arg5: memref<128x128xf32, #tpu.memory_space<vmem>>, %arg6: memref<128x128xf32, #tpu.memory_space<vmem>>, %arg7: memref<8x384xf32, #tpu.memory_space<vmem>>, %arg8: memref<128x64xf32, #tpu.memory_space<vmem>>, %arg9: memref<64x128xf32, #tpu.memory_space<vmem>>, %arg10: memref<1x8x128xf32, #tpu.memory_space<vmem>>) attributes {dimension_semantics = [#tpu.dimension_semantics<parallel>], iteration_bounds = array<i64: 4>, scalar_prefetch = 0 : i64, scratch_operands = 0 : i64, tpu.core_type = #tpu.core_type<tc>, window_params = [{transform_indices = @transform_0, window_bounds = array<i64: 1, 8, 128>}, {pipeline_mode = #tpu.pipeline_mode<synchronous>, transform_indices = @transform_1, window_bounds = array<i64: 128, 128>}, {pipeline_mode = #tpu.pipeline_mode<synchronous>, transform_indices = @transform_2, window_bounds = array<i64: 128, 192>}, {pipeline_mode = #tpu.pipeline_mode<synchronous>, transform_indices = @transform_3, window_bounds = array<i64: 192, 384>}, {pipeline_mode = #tpu.pipeline_mode<synchronous>, transform_indices = @transform_4, window_bounds = array<i64: 128, 128>}, {pipeline_mode = #tpu.pipeline_mode<synchronous>, transform_indices = @transform_5, window_bounds = array<i64: 128, 128>}, {pipeline_mode = #tpu.pipeline_mode<synchronous>, transform_indices = @transform_6, window_bounds = array<i64: 8, 384>}, {pipeline_mode = #tpu.pipeline_mode<synchronous>, transform_indices = @transform_7, window_bounds = array<i64: 128, 64>}, {pipeline_mode = #tpu.pipeline_mode<synchronous>, transform_indices = @transform_8, window_bounds = array<i64: 64, 128>}, {transform_indices = @transform_9, window_bounds = array<i64: 1, 8, 128>}]} {
    %c0 = arith.constant 0 : index
    %c0_0 = arith.constant 0 : index
    %c0_1 = arith.constant 0 : index
    %0 = vector.load %arg1[%c0, %c0_0, %c0_1] : memref<1x8x128xf32, #tpu.memory_space<vmem>>, vector<1x8x128xf32>
    %1 = vector.shape_cast %0 : vector<1x8x128xf32> to vector<8x128xf32>
    %c0_2 = arith.constant 0 : index
    %c0_3 = arith.constant 0 : index
    %2 = vector.load %arg2[%c0_2, %c0_3] : memref<128x128xf32, #tpu.memory_space<vmem>>, vector<128x128xf32>
    %cst = arith.constant dense<0.000000e+00> : vector<8x128xf32>
    %3 = tpu.matmul %1, %2, %cst {dimension_numbers = #tpu.dot_dimension_numbers<[1], [0], [0], [1], [0, 0, 1, 1], [], []>} : vector<8x128xf32>, vector<128x128xf32>, vector<8x128xf32> -> vector<8x128xf32>
    %c0_4 = arith.constant 0 : index
    %c0_5 = arith.constant 0 : index
    %4 = vector.load %arg7[%c0_4, %c0_5] : memref<8x384xf32, #tpu.memory_space<vmem>>, vector<1x128xf32>
    %5 = vector.broadcast %4 : vector<1x128xf32> to vector<8x128xf32>
    %6 = arith.addf %3, %5 : vector<8x128xf32>
    %cst_6 = arith.constant 0.000000e+00 : f32
    %7 = vector.broadcast %cst_6 : f32 to vector<8x128xf32>
    %8 = arith.maximumf %6, %7 : vector<8x128xf32>
    %c0_7 = arith.constant 0 : index
    %c0_8 = arith.constant 0 : index
    %9 = vector.load %arg3[%c0_7, %c0_8] : memref<128x192xf32, #tpu.memory_space<vmem>>, vector<128x192xf32>
    %cst_9 = arith.constant dense<0.000000e+00> : vector<8x192xf32>
    %10 = tpu.matmul %8, %9, %cst_9 {dimension_numbers = #tpu.dot_dimension_numbers<[1], [0], [0], [1], [0, 0, 1, 1], [], []>} : vector<8x128xf32>, vector<128x192xf32>, vector<8x192xf32> -> vector<8x192xf32>
    %c1 = arith.constant 1 : index
    %c0_10 = arith.constant 0 : index
    %11 = vector.load %arg7[%c1, %c0_10] : memref<8x384xf32, #tpu.memory_space<vmem>>, vector<1x192xf32>
    %12 = vector.broadcast %11 : vector<1x192xf32> to vector<8x192xf32>
    %13 = arith.addf %10, %12 : vector<8x192xf32>
    %cst_11 = arith.constant 0.000000e+00 : f32
    %14 = vector.broadcast %cst_11 : f32 to vector<8x192xf32>
    %15 = arith.maximumf %13, %14 : vector<8x192xf32>
    %c0_12 = arith.constant 0 : index
    %c0_13 = arith.constant 0 : index
    %16 = vector.load %arg4[%c0_12, %c0_13] : memref<192x384xf32, #tpu.memory_space<vmem>>, vector<192x384xf32>
    %cst_14 = arith.constant dense<0.000000e+00> : vector<8x384xf32>
    %17 = tpu.matmul %15, %16, %cst_14 {dimension_numbers = #tpu.dot_dimension_numbers<[1], [0], [0], [1], [0, 0, 1, 1], [], []>} : vector<8x192xf32>, vector<192x384xf32>, vector<8x384xf32> -> vector<8x384xf32>
    %c2 = arith.constant 2 : index
    %c0_15 = arith.constant 0 : index
    %18 = vector.load %arg7[%c2, %c0_15] : memref<8x384xf32, #tpu.memory_space<vmem>>, vector<1x384xf32>
    %19 = vector.broadcast %18 : vector<1x384xf32> to vector<8x384xf32>
    %20 = arith.addf %17, %19 : vector<8x384xf32>
    %21 = vector.extract_strided_slice %20 {offsets = [0, 0], sizes = [8, 128], strides = [1, 1]} : vector<8x384xf32> to vector<8x128xf32>
    %cst_16 = arith.constant 0.353553385 : f32
    %22 = vector.broadcast %cst_16 : f32 to vector<8x128xf32>
    %23 = arith.mulf %21, %22 : vector<8x128xf32>
    %24 = vector.extract_strided_slice %20 {offsets = [0, 128], sizes = [8, 128], strides = [1, 1]} : vector<8x384xf32> to vector<8x128xf32>
    %25 = vector.extract_strided_slice %20 {offsets = [0, 256], sizes = [8, 128], strides = [1, 1]} : vector<8x384xf32> to vector<8x128xf32>
    %26 = tpu.transpose %24, [1, 0] : vector<8x128xf32> -> vector<128x8xf32>
    %27 = tpu.concatenate %26, %26, %26, %26, %26, %26, %26, %26 in 1 : vector<128x8xf32>, vector<128x8xf32>, vector<128x8xf32>, vector<128x8xf32>, vector<128x8xf32>, vector<128x8xf32>, vector<128x8xf32>, vector<128x8xf32> -> vector<128x64xf32>
    %c0_17 = arith.constant 0 : index
    %c0_18 = arith.constant 0 : index
    %28 = vector.load %arg8[%c0_17, %c0_18] : memref<128x64xf32, #tpu.memory_space<vmem>>, vector<128x64xf32>
    %29 = arith.mulf %27, %28 : vector<128x64xf32>
    %cst_19 = arith.constant dense<0.000000e+00> : vector<8x64xf32>
    %30 = tpu.matmul %23, %29, %cst_19 {dimension_numbers = #tpu.dot_dimension_numbers<[1], [0], [0], [1], [0, 0, 1, 1], [], []>} : vector<8x128xf32>, vector<128x64xf32>, vector<8x64xf32> -> vector<8x64xf32>
    %cst_20 = arith.constant dense<0xFF800000> : vector<8xf32>
    %31 = vector.multi_reduction <maximumf>, %30, %cst_20 [1] : vector<8x64xf32> to vector<8xf32>
    %32 = vector.shape_cast %31 : vector<8xf32> to vector<8x1xf32>
    %33 = vector.broadcast %32 : vector<8x1xf32> to vector<8x64xf32>
    %34 = arith.subf %30, %33 : vector<8x64xf32>
    %35 = math.exp %34 : vector<8x64xf32>
    %36 = tpu.concatenate %25, %25, %25, %25, %25, %25, %25, %25 in 0 : vector<8x128xf32>, vector<8x128xf32>, vector<8x128xf32>, vector<8x128xf32>, vector<8x128xf32>, vector<8x128xf32>, vector<8x128xf32>, vector<8x128xf32> -> vector<64x128xf32>
    %c0_21 = arith.constant 0 : index
    %c0_22 = arith.constant 0 : index
    %37 = vector.load %arg9[%c0_21, %c0_22] : memref<64x128xf32, #tpu.memory_space<vmem>>, vector<64x128xf32>
    %38 = arith.mulf %36, %37 : vector<64x128xf32>
    %c0_23 = arith.constant 0 : index
    %c0_24 = arith.constant 0 : index
    %39 = vector.load %arg9[%c0_23, %c0_24] : memref<64x128xf32, #tpu.memory_space<vmem>>, vector<64x128xf32>
    %40 = tpu.concatenate %38, %39 in 1 : vector<64x128xf32>, vector<64x128xf32> -> vector<64x256xf32>
    %cst_25 = arith.constant dense<0.000000e+00> : vector<8x256xf32>
    %41 = tpu.matmul %35, %40, %cst_25 {dimension_numbers = #tpu.dot_dimension_numbers<[1], [0], [0], [1], [0, 0, 1, 1], [], []>} : vector<8x64xf32>, vector<64x256xf32>, vector<8x256xf32> -> vector<8x256xf32>
    %42 = vector.extract_strided_slice %41 {offsets = [0, 128], sizes = [8, 128], strides = [1, 1]} : vector<8x256xf32> to vector<8x128xf32>
    %cst_26 = arith.constant 1.000000e-30 : f32
    %43 = vector.broadcast %cst_26 : f32 to vector<8x128xf32>
    %44 = arith.maximumf %42, %43 : vector<8x128xf32>
    %45 = vector.extract_strided_slice %41 {offsets = [0, 0], sizes = [8, 128], strides = [1, 1]} : vector<8x256xf32> to vector<8x128xf32>
    %46 = tpu.reciprocal %44 {approx = true} : vector<8x128xf32> -> vector<8x128xf32>
    %47 = arith.mulf %45, %46 : vector<8x128xf32>
    %c0_27 = arith.constant 0 : index
    %c0_28 = arith.constant 0 : index
    %48 = vector.load %arg5[%c0_27, %c0_28] : memref<128x128xf32, #tpu.memory_space<vmem>>, vector<128x128xf32>
    %cst_29 = arith.constant dense<0.000000e+00> : vector<8x128xf32>
    %49 = tpu.matmul %47, %48, %cst_29 {dimension_numbers = #tpu.dot_dimension_numbers<[1], [0], [0], [1], [0, 0, 1, 1], [], []>} : vector<8x128xf32>, vector<128x128xf32>, vector<8x128xf32> -> vector<8x128xf32>
    %c3 = arith.constant 3 : index
    %c0_30 = arith.constant 0 : index
    %50 = vector.load %arg7[%c3, %c0_30] : memref<8x384xf32, #tpu.memory_space<vmem>>, vector<1x128xf32>
    %51 = vector.broadcast %50 : vector<1x128xf32> to vector<8x128xf32>
    %52 = arith.addf %49, %51 : vector<8x128xf32>
    %53 = arith.addf %52, %8 : vector<8x128xf32>
    %c0_31 = arith.constant 0 : index
    %c0_32 = arith.constant 0 : index
    %54 = vector.load %arg6[%c0_31, %c0_32] : memref<128x128xf32, #tpu.memory_space<vmem>>, vector<128x128xf32>
    %cst_33 = arith.constant dense<0.000000e+00> : vector<8x128xf32>
    %55 = tpu.matmul %53, %54, %cst_33 {dimension_numbers = #tpu.dot_dimension_numbers<[1], [0], [0], [1], [0, 0, 1, 1], [], []>} : vector<8x128xf32>, vector<128x128xf32>, vector<8x128xf32> -> vector<8x128xf32>
    %c4 = arith.constant 4 : index
    %c0_34 = arith.constant 0 : index
    %56 = vector.load %arg7[%c4, %c0_34] : memref<8x384xf32, #tpu.memory_space<vmem>>, vector<1x128xf32>
    %57 = vector.broadcast %56 : vector<1x128xf32> to vector<8x128xf32>
    %58 = arith.addf %55, %57 : vector<8x128xf32>
    %c0_35 = arith.constant 0 : index
    %c0_36 = arith.constant 0 : index
    %c0_37 = arith.constant 0 : index
    %59 = vector.load %arg10[%c0_35, %c0_36, %c0_37] : memref<1x8x128xf32, #tpu.memory_space<vmem>>, vector<1x8x128xf32>
    %60 = vector.shape_cast %59 : vector<1x8x128xf32> to vector<8x128xf32>
    %61 = vector.shape_cast %58 : vector<8x128xf32> to vector<1x8x128xf32>
    tpu.vector_store %arg10[%c0_35, %c0_36, %c0_37], %61 {strides = array<i32>} : memref<1x8x128xf32, #tpu.memory_space<vmem>>, vector<1x8x128xf32>,
    return
  }
  func.func @transform_0(%arg0: i32) -> (i32, i32, i32) {
    %c0_i32 = arith.constant 0 : i32
    %c0_i32_0 = arith.constant 0 : i32
    %c0_i32_1 = arith.constant 0 : i32
    return %arg0, %c0_i32, %c0_i32_0 : i32, i32, i32
  }
  func.func @transform_1(%arg0: i32) -> (i32, i32) {
    %c0_i32 = arith.constant 0 : i32
    %c0_i32_0 = arith.constant 0 : i32
    %c0_i32_1 = arith.constant 0 : i32
    return %c0_i32, %c0_i32_0 : i32, i32
  }
  func.func @transform_2(%arg0: i32) -> (i32, i32) {
    %c0_i32 = arith.constant 0 : i32
    %c0_i32_0 = arith.constant 0 : i32
    %c0_i32_1 = arith.constant 0 : i32
    return %c0_i32, %c0_i32_0 : i32, i32
  }
  func.func @transform_3(%arg0: i32) -> (i32, i32) {
    %c0_i32 = arith.constant 0 : i32
    %c0_i32_0 = arith.constant 0 : i32
    %c0_i32_1 = arith.constant 0 : i32
    return %c0_i32, %c0_i32_0 : i32, i32
  }
  func.func @transform_4(%arg0: i32) -> (i32, i32) {
    %c0_i32 = arith.constant 0 : i32
    %c0_i32_0 = arith.constant 0 : i32
    %c0_i32_1 = arith.constant 0 : i32
    return %c0_i32, %c0_i32_0 : i32, i32
  }
  func.func @transform_5(%arg0: i32) -> (i32, i32) {
    %c0_i32 = arith.constant 0 : i32
    %c0_i32_0 = arith.constant 0 : i32
    %c0_i32_1 = arith.constant 0 : i32
    return %c0_i32, %c0_i32_0 : i32, i32
  }
  func.func @transform_6(%arg0: i32) -> (i32, i32) {
    %c0_i32 = arith.constant 0 : i32
    %c0_i32_0 = arith.constant 0 : i32
    %c0_i32_1 = arith.constant 0 : i32
    return %c0_i32, %c0_i32_0 : i32, i32
  }
  func.func @transform_7(%arg0: i32) -> (i32, i32) {
    %c0_i32 = arith.constant 0 : i32
    %c0_i32_0 = arith.constant 0 : i32
    %c0_i32_1 = arith.constant 0 : i32
    return %c0_i32, %c0_i32_0 : i32, i32
  }
  func.func @transform_8(%arg0: i32) -> (i32, i32) {
    %c0_i32 = arith.constant 0 : i32
    %c0_i32_0 = arith.constant 0 : i32
    %c0_i32_1 = arith.constant 0 : i32
    return %c0_i32, %c0_i32_0 : i32, i32
  }
  func.func @transform_9(%arg0: i32) -> (i32, i32, i32) {
    %c0_i32 = arith.constant 0 : i32
    %c0_i32_0 = arith.constant 0 : i32
    %c0_i32_1 = arith.constant 0 : i32
    return %arg0, %c0_i32, %c0_i32_0 : i32, i32, i32
  }
}

</mosaic_0001>

<llo_original>
// kernel: cmfa_forward.1
$region0: #{cmfa_forward.1}
  #allocation0 [shape = 'u32[]', space=smem, size = 0x4, offset = 0x4, fixed_abs, tag = 'smem constant byte address 0x4 - core index']
  #allocation1 [shape = 'u32[144,128]{1,0:T(1,128)}', space=vmem, size = 0x12000, scoped, tag = 'internal scratch']
  %s0 = inlined_call_operand.vmem [shape: f32[4,8,128], index: 0, kind: input, shape index: {}]
  %s1 = inlined_call_operand.vmem [shape: f32[128,128], index: 1, kind: input, shape index: {}]
  %s2 = inlined_call_operand.vmem [shape: f32[128,192], index: 2, kind: input, shape index: {}]
  %s3 = inlined_call_operand.vmem [shape: f32[192,384], index: 3, kind: input, shape index: {}]
  %s4 = inlined_call_operand.hbm [shape: f32[128,128], index: 4, kind: input, shape index: {}]
  %s5 = inlined_call_operand.hbm [shape: f32[128,128], index: 5, kind: input, shape index: {}]
  %s6 = inlined_call_operand.vmem [shape: f32[8,384], index: 6, kind: input, shape index: {}]
  %s7 = inlined_call_operand.vmem [shape: f32[128,64], index: 7, kind: input, shape index: {}]
  %s8 = inlined_call_operand.hbm [shape: f32[64,128], index: 8, kind: input, shape index: {}]
  %s9 = inlined_call_operand.hbm [shape: f32[4,8,128], index: 9, kind: output, shape index: {}]
  %s10 = sld [smem:[#allocation0]]
  $region81: #{cmfa_forward.1} parent=0
    _
  %s12 = ssub.s32 1, %s10
  %s13 = scalar_select 0, %s12, %s10
  $region1: #{cmfa_forward.1} parent=0
    #allocation2 [shape = 'u8[65536]{0}', space=vmem, size = 0x10000, scoped, tag = 'input window, operand 4, single buffered']
    #allocation3 [shape = 's32[2]{0}', space=sflag, size = 0x8, scoped, tag = 'scoped memory for cmfa_forward.1']
    #allocation4 [shape = 's32[2]{0}', space=sflag, size = 0x8, scoped, tag = 'scoped memory for cmfa_forward.1']
    #allocation5 [shape = 'u8[65536]{0}', space=vmem, size = 0x10000, scoped, tag = 'input window, operand 5, single buffered']
    #allocation6 [shape = 's32[1]{0}', space=sflag, size = 0x4, scoped, tag = 'scoped memory for cmfa_forward.1']
    #allocation7 [shape = 'u8[32768]{0}', space=vmem, size = 0x8000, scoped, tag = 'input window, operand 8, single buffered']
    #allocation8 [shape = 'u8[8192]{0}', space=vmem, size = 0x2000, scoped, tag = 'output window, operand 0']
    %14 = vsyncpa [#allocation3], 0
    %15 = vsyncpa [#allocation6], 0
    %16 = vsyncpa [#allocation4], 0
    %s17 = scalar_lea.sflag [#allocation4], 1
    %18 = vsyncpa %s17, 0
    loop: start=0, step=1, limit=6
    $region2: #{cmfa_forward.1} parent=1 // loop_pre_header
      _
    $region3: #{cmfa_forward.1} parent=1 // loop_header
      %s20 = sphi 0, %s24
      %p21 = scmp.ge.s32.totalorder %s20, 6
      %s30 = sphi 0, %s32
      %s33 = sphi 0, %s30
      %s34 = sphi 0, %s33
      %s50 = sphi 0, %s34
      %s54 = sphi 0, %s54
      %s56 = sphi 0, %s54
      %s57 = sphi 0, %s56
      %s71 = sphi 0, %s57
      %s75 = sphi 0, %s75
      %s77 = sphi 0, %s75
      %s78 = sphi 0, %s77
      %s92 = sphi 0, %s78
      %s96 = sphi 0, %s96
      %s98 = sphi 0, %s96
      %s99 = sphi 0, %s98
      %s113 = sphi 0, %s99
      %s117 = sphi 0, %s117
      %s119 = sphi 0, %s117
      %s120 = sphi 0, %s119
      %s134 = sphi 0, %s120
      %s138 = sphi 0, %s138
      %s140 = sphi 0, %s138
      %s141 = sphi 0, %s140
      %s155 = sphi 0, %s141
      %s159 = sphi 0, %s159
      %s161 = sphi 0, %s159
      %s162 = sphi 0, %s161
      %s176 = sphi 0, %s162
      %s180 = sphi 0, %s180
      %s182 = sphi 0, %s180
      %s183 = sphi 0, %s182
      %s197 = sphi 0, %s183
      %s201 = sphi 0, %s201
      %s203 = sphi 0, %s201
      %s204 = sphi 0, %s203
      %s218 = sphi 0, %s204
      %s224 = sphi 0, %s226
      %s227 = sphi 0, %s224
      %s228 = sphi 0, %s227
      %s244 = sphi 0, %s228
    $region4: #{cmfa_forward.1} parent=1 // loop_header_branch
      %23 = sbr.rel (%p21) target = $region8
    $region5: #{cmfa_forward.1} parent=1 // loop_body
      %s25 = ssub.s32 %s20, 1
      %s26 = ssub.s32 %s20, 2
      %s27 = sadd.s32 %s20, 1
      %s28 = ssub.s32 %s20, %s27
      %p29 = scmp.eq.s32.totalorder %s28, 0
      %s31 = sadd.s32 %s30, 1
      %s32 = scalar_select %p29, %s30, %s31
      %p35 = pneg %p29
      %p36 = scmp.eq.s32.totalorder %s20, 3
      %p37 = por %p35, %p36
      %p38 = scmp.ne.s32.totalorder %s30, %s33
      %p39 = scmp.eq.s32.totalorder %s20, 0
      %p40 = por %p38, %p39
      %p41 = scmp.ne.s32.totalorder %s30, %s33
      %p42 = scmp.eq.s32.totalorder %s25, 3
      %p43 = por %p41, %p42
      %p44 = scmp.ne.s32.totalorder %s33, %s34
      %p45 = scmp.eq.s32.totalorder %s25, 0
      %p46 = por %p44, %p45
      %p47 = scmp.ne.s32.totalorder %s33, %s34
      %p48 = scmp.eq.s32.totalorder %s26, 3
      %p49 = por %p47, %p48
      %p51 = scmp.ne.s32.totalorder %s34, %s50
      %p52 = scmp.eq.s32.totalorder %s26, 0
      %p53 = por %p51, %p52
      %s55 = sadd.s32 %s54, 1
      %p58 = scmp.eq.s32.totalorder %s20, 3
      %p59 = scmp.ne.s32.totalorder %s54, %s56
      %p60 = scmp.eq.s32.totalorder %s20, 0
      %p61 = por %p59, %p60
      %p62 = scmp.ne.s32.totalorder %s54, %s56
      %p63 = scmp.eq.s32.totalorder %s25, 3
      %p64 = por %p62, %p63
      %p65 = scmp.ne.s32.totalorder %s56, %s57
      %p66 = scmp.eq.s32.totalorder %s25, 0
      %p67 = por %p65, %p66
      %p68 = scmp.ne.s32.totalorder %s56, %s57
      %p69 = scmp.eq.s32.totalorder %s26, 3
      %p70 = por %p68, %p69
      %p72 = scmp.ne.s32.totalorder %s57, %s71
      %p73 = scmp.eq.s32.totalorder %s26, 0
      %p74 = por %p72, %p73
      %s76 = sadd.s32 %s75, 1
      %p79 = scmp.eq.s32.totalorder %s20, 3
      %p80 = scmp.ne.s32.totalorder %s75, %s77
      %p81 = scmp.eq.s32.totalorder %s20, 0
      %p82 = por %p80, %p81
      %p83 = scmp.ne.s32.totalorder %s75, %s77
      %p84 = scmp.eq.s32.totalorder %s25, 3
      %p85 = por %p83, %p84
      %p86 = scmp.ne.s32.totalorder %s77, %s78
      %p87 = scmp.eq.s32.totalorder %s25, 0
      %p88 = por %p86, %p87
      %p89 = scmp.ne.s32.totalorder %s77, %s78
      %p90 = scmp.eq.s32.totalorder %s26, 3
      %p91 = por %p89, %p90
      %p93 = scmp.ne.s32.totalorder %s78, %s92
      %p94 = scmp.eq.s32.totalorder %s26, 0
      %p95 = por %p93, %p94
      %s97 = sadd.s32 %s96, 1
      %p100 = scmp.eq.s32.totalorder %s20, 3
      %p101 = scmp.ne.s32.totalorder %s96, %s98
      %p102 = scmp.eq.s32.totalorder %s20, 0
      %p103 = por %p101, %p102
      %p104 = scmp.ne.s32.totalorder %s96, %s98
      %p105 = scmp.eq.s32.totalorder %s25, 3
      %p106 = por %p104, %p105
      %p107 = scmp.ne.s32.totalorder %s98, %s99
      %p108 = scmp.eq.s32.totalorder %s25, 0
      %p109 = por %p107, %p108
      %p110 = scmp.ne.s32.totalorder %s98, %s99
      %p111 = scmp.eq.s32.totalorder %s26, 3
      %p112 = por %p110, %p111
      %p114 = scmp.ne.s32.totalorder %s99, %s113
      %p115 = scmp.eq.s32.totalorder %s26, 0
      %p116 = por %p114, %p115
      %s118 = sadd.s32 %s117, 1
      %p121 = scmp.eq.s32.totalorder %s20, 3
      %p122 = scmp.ne.s32.totalorder %s117, %s119
      %p123 = scmp.eq.s32.totalorder %s20, 0
      %p124 = por %p122, %p123
      %p125 = scmp.ne.s32.totalorder %s117, %s119
      %p126 = scmp.eq.s32.totalorder %s25, 3
      %p127 = por %p125, %p126
      %p128 = scmp.ne.s32.totalorder %s119, %s120
      %p129 = scmp.eq.s32.totalorder %s25, 0
      %p130 = por %p128, %p129
      %p131 = scmp.ne.s32.totalorder %s119, %s120
      %p132 = scmp.eq.s32.totalorder %s26, 3
      %p133 = por %p131, %p132
      %p135 = scmp.ne.s32.totalorder %s120, %s134
      %p136 = scmp.eq.s32.totalorder %s26, 0
      %p137 = por %p135, %p136
      %s139 = sadd.s32 %s138, 1
      %p142 = scmp.eq.s32.totalorder %s20, 3
      %p143 = scmp.ne.s32.totalorder %s138, %s140
      %p144 = scmp.eq.s32.totalorder %s20, 0
      %p145 = por %p143, %p144
      %p146 = scmp.ne.s32.totalorder %s138, %s140
      %p147 = scmp.eq.s32.totalorder %s25, 3
      %p148 = por %p146, %p147
      %p149 = scmp.ne.s32.totalorder %s140, %s141
      %p150 = scmp.eq.s32.totalorder %s25, 0
      %p151 = por %p149, %p150
      %p152 = scmp.ne.s32.totalorder %s140, %s141
      %p153 = scmp.eq.s32.totalorder %s26, 3
      %p154 = por %p152, %p153
      %p156 = scmp.ne.s32.totalorder %s141, %s155
      %p157 = scmp.eq.s32.totalorder %s26, 0
      %p158 = por %p156, %p157
      %s160 = sadd.s32 %s159, 1
      %p163 = scmp.eq.s32.totalorder %s20, 3
      %p164 = scmp.ne.s32.totalorder %s159, %s161
      %p165 = scmp.eq.s32.totalorder %s20, 0
      %p166 = por %p164, %p165
      %p167 = scmp.ne.s32.totalorder %s159, %s161
      %p168 = scmp.eq.s32.totalorder %s25, 3
      %p169 = por %p167, %p168
      %p170 = scmp.ne.s32.totalorder %s161, %s162
      %p171 = scmp.eq.s32.totalorder %s25, 0
      %p172 = por %p170, %p171
      %p173 = scmp.ne.s32.totalorder %s161, %s162
      %p174 = scmp.eq.s32.totalorder %s26, 3
      %p175 = por %p173, %p174
      %p177 = scmp.ne.s32.totalorder %s162, %s176
      %p178 = scmp.eq.s32.totalorder %s26, 0
      %p179 = por %p177, %p178
      %s181 = sadd.s32 %s180, 1
      %p184 = scmp.eq.s32.totalorder %s20, 3
      %p185 = scmp.ne.s32.totalorder %s180, %s182
      %p186 = scmp.eq.s32.totalorder %s20, 0
      %p187 = por %p185, %p186
      %p188 = scmp.ne.s32.totalorder %s180, %s182
      %p189 = scmp.eq.s32.totalorder %s25, 3
      %p190 = por %p188, %p189
      %p191 = scmp.ne.s32.totalorder %s182, %s183
      %p192 = scmp.eq.s32.totalorder %s25, 0
      %p193 = por %p191, %p192
      %p194 = scmp.ne.s32.totalorder %s182, %s183
      %p195 = scmp.eq.s32.totalorder %s26, 3
      %p196 = por %p194, %p195
      %p198 = scmp.ne.s32.totalorder %s183, %s197
      %p199 = scmp.eq.s32.totalorder %s26, 0
      %p200 = por %p198, %p199
      %s202 = sadd.s32 %s201, 1
      %p205 = scmp.eq.s32.totalorder %s20, 3
      %p206 = scmp.ne.s32.totalorder %s201, %s203
      %p207 = scmp.eq.s32.totalorder %s20, 0
      %p208 = por %p206, %p207
      %p209 = scmp.ne.s32.totalorder %s201, %s203
      %p210 = scmp.eq.s32.totalorder %s25, 3
      %p211 = por %p209, %p210
      %p212 = scmp.ne.s32.totalorder %s203, %s204
      %p213 = scmp.eq.s32.totalorder %s25, 0
      %p214 = por %p212, %p213
      %p215 = scmp.ne.s32.totalorder %s203, %s204
      %p216 = scmp.eq.s32.totalorder %s26, 3
      %p217 = por %p215, %p216
      %p219 = scmp.ne.s32.totalorder %s204, %s218
      %p220 = scmp.eq.s32.totalorder %s26, 0
      %p221 = por %p219, %p220
      %s222 = ssub.s32 %s20, %s27
      %p223 = scmp.eq.s32.totalorder %s222, 0
      %s225 = sadd.s32 %s224, 1
      %s226 = scalar_select %p223, %s224, %s225
      %p229 = pneg %p223
      %p230 = scmp.eq.s32.totalorder %s20, 3
      %p231 = por %p229, %p230
      %p232 = scmp.ne.s32.totalorder %s224, %s227
      %p233 = scmp.eq.s32.totalorder %s20, 0
      %p234 = por %p232, %p233
      %p235 = scmp.ne.s32.totalorder %s224, %s227
      %p236 = scmp.eq.s32.totalorder %s25, 3
      %p237 = por %p235, %p236
      %p238 = scmp.ne.s32.totalorder %s227, %s228
      %p239 = scmp.eq.s32.totalorder %s25, 0
      %p240 = por %p238, %p239
      %p241 = scmp.ne.s32.totalorder %s227, %s228
      %p242 = scmp.eq.s32.totalorder %s26, 3
      %p243 = por %p241, %p242
      %p245 = scmp.ne.s32.totalorder %s228, %s244
      %p246 = scmp.eq.s32.totalorder %s26, 0
      %p247 = por %p245, %p246
      %p248 = scmp.le.s32.totalorder 1, %s20
      %p249 = scmp.lt.s32.totalorder %s20, 5
      %p250 = pnand %p248, %p249
      %p251 = pneg %p250
      // Predicated region
      $region9: #{cmfa_forward.1} parent=5 // pred_check
        _
      $region10: #{cmfa_forward.1} parent=5 // pred_check_branch
        %253 = sbr.rel (%p250) target = $region12
      $region11: #{cmfa_forward.1} parent=5 // pred_region
        %s254 = ssub.s32 %s20, 1
        // Predicated region
        $region13: #{cmfa_forward.1} parent=11 // pred_check
          %p255 = pneg %p67
        $region14: #{cmfa_forward.1} parent=11 // pred_check_branch
          %257 = sbr.rel (%p255) target = $region16
        $region15: #{cmfa_forward.1} parent=11 // pred_region
          _
        $region16: #{cmfa_forward.1} parent=11 // pred_fallthru
          _
        // Predicated region
        $region17: #{cmfa_forward.1} parent=11 // pred_check
          %p258 = pneg %p88
        $region18: #{cmfa_forward.1} parent=11 // pred_check_branch
          %260 = sbr.rel (%p258) target = $region20
        $region19: #{cmfa_forward.1} parent=11 // pred_region
          _
        $region20: #{cmfa_forward.1} parent=11 // pred_fallthru
          _
        // Predicated region
        $region21: #{cmfa_forward.1} parent=11 // pred_check
          %p261 = pneg %p109
        $region22: #{cmfa_forward.1} parent=11 // pred_check_branch
          %263 = sbr.rel (%p261) target = $region24
        $region23: #{cmfa_forward.1} parent=11 // pred_region
          _
        $region24: #{cmfa_forward.1} parent=11 // pred_fallthru
          _
        // Predicated region
        $region25: #{cmfa_forward.1} parent=11 // pred_check
          %p264 = pneg %p130
        $region26: #{cmfa_forward.1} parent=11 // pred_check_branch
          %266 = sbr.rel (%p264) target = $region28
        $region27: #{cmfa_forward.1} parent=11 // pred_region
          %s268 = ssub.s32 2048, 2048
          %269 = vsyncadd [#allocation3], %s268
          %s270 = sshll.u32 [#allocation2], 4
          %s271 = int_to_ptr.vmem [resolvable:$true] %s270
          %276 = dma.hbm_to_vmem [thread:$0]  %s4, 2048, %s271, [#allocation3], 128, 128, 8
        $region28: #{cmfa_forward.1} parent=11 // pred_fallthru
          _
        // Predicated region
        $region29: #{cmfa_forward.1} parent=11 // pred_check
          %p277 = pneg %p151
        $region30: #{cmfa_forward.1} parent=11 // pred_check_branch
          %279 = sbr.rel (%p277) target = $region32
        $region31: #{cmfa_forward.1} parent=11 // pred_region
          %s281 = ssub.s32 2048, 2048
          %282 = vsyncadd [#allocation6], %s281
          %s283 = sshll.u32 [#allocation5], 4
          %s284 = int_to_ptr.vmem [resolvable:$true] %s283
          %289 = dma.hbm_to_vmem [thread:$0]  %s5, 2048, %s284, [#allocation6], 128, 128, 8
        $region32: #{cmfa_forward.1} parent=11 // pred_fallthru
          _
        // Predicated region
        $region33: #{cmfa_forward.1} parent=11 // pred_check
          %p290 = pneg %p172
        $region34: #{cmfa_forward.1} parent=11 // pred_check_branch
          %292 = sbr.rel (%p290) target = $region36
        $region35: #{cmfa_forward.1} parent=11 // pred_region
          _
        $region36: #{cmfa_forward.1} parent=11 // pred_fallthru
          _
        // Predicated region
        $region37: #{cmfa_forward.1} parent=11 // pred_check
          %p293 = pneg %p193
        $region38: #{cmfa_forward.1} parent=11 // pred_check_branch
          %295 = sbr.rel (%p293) target = $region40
        $region39: #{cmfa_forward.1} parent=11 // pred_region
          _
        $region40: #{cmfa_forward.1} parent=11 // pred_fallthru
          _
        // Predicated region
        $region41: #{cmfa_forward.1} parent=11 // pred_check
          %p296 = pneg %p214
        $region42: #{cmfa_forward.1} parent=11 // pred_check_branch
          %298 = sbr.rel (%p296) target = $region44
        $region43: #{cmfa_forward.1} parent=11 // pred_region
          %s300 = ssub.s32 1024, 1024
          %301 = vsyncadd [#allocation6], %s300
          %s302 = sshll.u32 [#allocation7], 4
          %s303 = int_to_ptr.vmem [resolvable:$true] %s302
          %308 = dma.hbm_to_vmem [thread:$0]  %s8, 1024, %s303, [#allocation6], 128, 128, 8
        $region44: #{cmfa_forward.1} parent=11 // pred_fallthru
          _
      $region12: #{cmfa_forward.1} parent=5 // pred_fallthru
        _
      %p309 = scmp.lt.s32.totalorder %s20, 4
      // Predicated region
      $region45: #{cmfa_forward.1} parent=5 // pred_check
        %p310 = pneg %p309
      $region46: #{cmfa_forward.1} parent=5 // pred_check_branch
        %312 = sbr.rel (%p310) target = $region48
      $region47: #{cmfa_forward.1} parent=5 // pred_region
        // Predicated region
        $region49: #{cmfa_forward.1} parent=47 // pred_check
          %p313 = pneg %p40
        $region50: #{cmfa_forward.1} parent=47 // pred_check_branch
          %315 = sbr.rel (%p313) target = $region52
        $region51: #{cmfa_forward.1} parent=47 // pred_region
          %p316 = scmp.lt.s32.totalorder %s20, 3
          %s317 = scalar_select %p316, %s20, 3
          %s318 = smul.addr %s317, 8
          %s319 = scalar_lea.vmem %s0, %s318
        $region52: #{cmfa_forward.1} parent=47 // pred_fallthru
          _
      $region48: #{cmfa_forward.1} parent=5 // pred_fallthru
        _
      %p320 = scmp.le.s32.totalorder 1, %s20
      %p321 = scmp.lt.s32.totalorder %s20, 5
      %p322 = pnand %p320, %p321
      %p323 = pneg %p322
      // Predicated region
      $region53: #{cmfa_forward.1} parent=5 // pred_check
        _
      $region54: #{cmfa_forward.1} parent=5 // pred_check_branch
        %325 = sbr.rel (%p322) target = $region56
      $region55: #{cmfa_forward.1} parent=5 // pred_region
        %s326 = ssub.s32 %s20, 1
        // Predicated region
        $region57: #{cmfa_forward.1} parent=55 // pred_check
          %p327 = pneg %p130
        $region58: #{cmfa_forward.1} parent=55 // pred_check_branch
          %329 = sbr.rel (%p327) target = $region60
        $region59: #{cmfa_forward.1} parent=55 // pred_region
          %330 = dma.done [#allocation3], 2048
        $region60: #{cmfa_forward.1} parent=55 // pred_fallthru
          _
        // Predicated region
        $region61: #{cmfa_forward.1} parent=55 // pred_check
          %p331 = pneg %p151
        $region62: #{cmfa_forward.1} parent=55 // pred_check_branch
          %333 = sbr.rel (%p331) target = $region64
        $region63: #{cmfa_forward.1} parent=55 // pred_region
          %334 = dma.done [#allocation6], 2048
        $region64: #{cmfa_forward.1} parent=55 // pred_fallthru
          _
        // Predicated region
        $region65: #{cmfa_forward.1} parent=55 // pred_check
          %p335 = pneg %p214
        $region66: #{cmfa_forward.1} parent=55 // pred_check_branch
          %337 = sbr.rel (%p335) target = $region68
        $region67: #{cmfa_forward.1} parent=55 // pred_region
          %338 = dma.done [#allocation6], 1024
        $region68: #{cmfa_forward.1} parent=55 // pred_fallthru
          _
        %p339 = scmp.lt.s32.totalorder %s25, 3
        %s340 = scalar_select %p339, %s25, 3
        %s341 = smul.addr %s340, 8
        %s342 = scalar_lea.vmem %s0, %s341
        %p343 = pneg %p46
        %p344 = pneg %p43
        %p345 = pneg %p67
        %p346 = pneg %p64
        %p347 = pneg %p88
        %p348 = pneg %p85
        %p349 = pneg %p109
        %p350 = pneg %p106
        %p351 = pneg %p130
        %p352 = pneg %p127
        %p353 = pneg %p151
        %p354 = pneg %p148
        %p355 = pneg %p172
        %p356 = pneg %p169
        %p357 = pneg %p193
        %p358 = pneg %p190
        %p359 = pneg %p214
        %p360 = pneg %p211
        %p361 = pneg %p240
        %p362 = pneg %p237
        %s363 = sand.u32 %s227, 1
        %s364 = scalar_lea.sflag [#allocation4], %s363
        %s365 = sand.u32 %s227, 1
        %s366 = smul.addr %s365, 8
        %s367 = scalar_lea.vmem [#allocation8], %s366
        %p368 = scmp.lt.s32.totalorder %s25, 3
        %s369 = scalar_select %p368, %s25, 3
        %s370 = smul.addr %s369, 8
        %s371 = scalar_lea.vmem %s0, %s370
        %v372 = vld [vmem:[%s371] sm:$0xff]
        %v373 = vld [vmem:[%s1] sm:$0xff]
        %v374 = vld [vmem:[%s1 + $0x8] sm:$0xff]
        %v375 = vld [vmem:[%s1 + $0x10] sm:$0xff]
        %v376 = vld [vmem:[%s1 + $0x18] sm:$0xff]
        %v377 = vld [vmem:[%s1 + $0x20] sm:$0xff]
        %v378 = vld [vmem:[%s1 + $0x28] sm:$0xff]
        %v379 = vld [vmem:[%s1 + $0x30] sm:$0xff]
        %v380 = vld [vmem:[%s1 + $0x38] sm:$0xff]
        %v381 = vld [vmem:[%s1 + $0x40] sm:$0xff]
        %v382 = vld [vmem:[%s1 + $0x48] sm:$0xff]
        %v383 = vld [vmem:[%s1 + $0x50] sm:$0xff]
        %v384 = vld [vmem:[%s1 + $0x58] sm:$0xff]
        %v385 = vld [vmem:[%s1 + $0x60] sm:$0xff]
        %v386 = vld [vmem:[%s1 + $0x68] sm:$0xff]
        %v387 = vld [vmem:[%s1 + $0x70] sm:$0xff]
        %v388 = vld [vmem:[%s1 + $0x78] sm:$0xff]
        %v389 = vld [vmem:[%s6] ss:$0 sm:$0xff]
        %390 = vmatprep.subr.mxu0 0.0
        %391 = vmatpush1.msra.mxu0 %v373
        %392 = vmatprep.subr.mxu0 0.0
        %393 = vmatpush1.msra.mxu0 %v374
        %394 = vmatprep.subr.mxu0 0.0
        %395 = vmatpush1.msra.mxu0 %v375
        %396 = vmatprep.subr.mxu0 0.0
        %397 = vmatpush1.msra.mxu0 %v376
        %398 = vmatprep.subr.mxu0 0.0
        %399 = vmatpush1.msra.mxu0 %v377
        %400 = vmatprep.subr.mxu0 0.0
        %401 = vmatpush1.msra.mxu0 %v378
        %402 = vmatprep.subr.mxu0 0.0
        %403 = vmatpush1.msra.mxu0 %v379
        %404 = vmatprep.subr.mxu0 0.0
        %405 = vmatpush1.msra.mxu0 %v380
        %406 = vmatprep.subr.mxu0 0.0
        %407 = vmatpush1.msra.mxu0 %v381
        %408 = vmatprep.subr.mxu0 0.0
        %409 = vmatpush1.msra.mxu0 %v382
        %410 = vmatprep.subr.mxu0 0.0
        %411 = vmatpush1.msra.mxu0 %v383
        %412 = vmatprep.subr.mxu0 0.0
        %413 = vmatpush1.msra.mxu0 %v384
        %414 = vmatprep.subr.mxu0 0.0
        %415 = vmatpush1.msra.mxu0 %v385
        %416 = vmatprep.subr.mxu0 0.0
        %417 = vmatpush1.msra.mxu0 %v386
        %418 = vmatprep.subr.mxu0 0.0
        %419 = vmatpush1.msra.mxu0 %v387
        %420 = vmatprep.subr.mxu0 0.0
        %421 = vmatpush1.msra.mxu0 %v388
        %422 = vmatprep.subr.mxu0 0.0
        %423 = vmatpush1.msra.mxu0 0.0
        %424 = vmatprep.subr.mxu0 0.0
        %425 = vmatpush1.msra.mxu0 0.0
        %426 = vmatprep.subr.mxu0 0.0
        %427 = vmatpush1.msra.mxu0 0.0
        %428 = vmatprep.subr.mxu0 0.0
        %429 = vmatpush1.msra.mxu0 0.0
        %430 = vmatprep.subr.mxu0 0.0
        %431 = vmatpush1.msra.mxu0 0.0
        %432 = vmatprep.subr.mxu0 0.0
        %433 = vmatpush1.msra.mxu0 0.0
        %434 = vmatprep.subr.mxu0 0.0
        %435 = vmatpush1.msra.mxu0 0.0
        %436 = vmatprep.subr.mxu0 0.0
        %437 = vmatpush1.msra.mxu0 0.0
        %438 = vmatprep.subr.mxu0 0.0
        %439 = vmatpush1.msra.mxu0 0.0
        %440 = vmatprep.subr.mxu0 0.0
        %441 = vmatpush1.msra.mxu0 0.0
        %442 = vmatprep.subr.mxu0 0.0
        %443 = vmatpush1.msra.mxu0 0.0
        %444 = vmatprep.subr.mxu0 0.0
        %445 = vmatpush1.msra.mxu0 0.0
        %446 = vmatprep.subr.mxu0 0.0
        %447 = vmatpush1.msra.mxu0 0.0
        %448 = vmatprep.subr.mxu0 0.0
        %449 = vmatpush1.msra.mxu0 0.0
        %450 = vmatprep.subr.mxu0 0.0
        %451 = vmatpush1.msra.mxu0 0.0
        %452 = vmatprep.subr.mxu0 0.0
        %453 = vmatpush1.msra.mxu0 0.0
        %454 = vmatprep.mubr.f32.mxu0 0.0
        %455 = vmatmul.mubr.f32.gmra.mrb[0].mxu0 %v372
        %v456 = vpop.f32.mrb[0].mxu0
        %v457 = vadd.f32 %v389, %v456
        %v458 = vpop.f32.mrb[0].mxu0
        %459 = vdwg.mxu0
        %v460 = vmax.f32 %v457, 0.0
        %v461 = vld [vmem:[%s2] sm:$0xff]
        %v462 = vld [vmem:[%s2 + $0x8] sm:$0xff]
        %v463 = vld [vmem:[%s2 + $0x10] sm:$0xff]
        %v464 = vld [vmem:[%s2 + $0x18] sm:$0xff]
        %v465 = vld [vmem:[%s2 + $0x20] sm:$0xff]
        %v466 = vld [vmem:[%s2 + $0x28] sm:$0xff]
        %v467 = vld [vmem:[%s2 + $0x30] sm:$0xff]
        %v468 = vld [vmem:[%s2 + $0x38] sm:$0xff]
        %v469 = vld [vmem:[%s2 + $0x40] sm:$0xff]
        %v470 = vld [vmem:[%s2 + $0x48] sm:$0xff]
        %v471 = vld [vmem:[%s2 + $0x50] sm:$0xff]
        %v472 = vld [vmem:[%s2 + $0x58] sm:$0xff]
        %v473 = vld [vmem:[%s2 + $0x60] sm:$0xff]
        %v474 = vld [vmem:[%s2 + $0x68] sm:$0xff]
        %v475 = vld [vmem:[%s2 + $0x70] sm:$0xff]
        %v476 = vld [vmem:[%s2 + $0x78] sm:$0xff]
        %v477 = vld [vmem:[%s2 + $0x80] sm:$0xff]
        %v478 = vld [vmem:[%s2 + $0x88] sm:$0xff]
        %v479 = vld [vmem:[%s2 + $0x90] sm:$0xff]
        %v480 = vld [vmem:[%s2 + $0x98] sm:$0xff]
        %v481 = vld [vmem:[%s2 + $0xa0] sm:$0xff]
        %v482 = vld [vmem:[%s2 + $0xa8] sm:$0xff]
        %v483 = vld [vmem:[%s2 + $0xb0] sm:$0xff]
        %v484 = vld [vmem:[%s2 + $0xb8] sm:$0xff]
        %v485 = vld [vmem:[%s2 + $0xc0] sm:$0xff]
        %v486 = vld [vmem:[%s2 + $0xc8] sm:$0xff]
        %v487 = vld [vmem:[%s2 + $0xd0] sm:$0xff]
        %v488 = vld [vmem:[%s2 + $0xd8] sm:$0xff]
        %v489 = vld [vmem:[%s2 + $0xe0] sm:$0xff]
        %v490 = vld [vmem:[%s2 + $0xe8] sm:$0xff]
        %v491 = vld [vmem:[%s2 + $0xf0] sm:$0xff]
        %v492 = vld [vmem:[%s2 + $0xf8] sm:$0xff]
        %s493 = scalar_lea.vmem %s6, 1
        %v494 = vld [vmem:[%s493] ss:$8 sm:$0x3]
        %v496 = vlaneseq
        %v497 = vshrl.u32 %v496, 7
        %v498 = vsub.s32 0, %v497
        %v499 = vrot.slane %v494, %v498
        %v500 = vlaneseq
        %v501 = vshrl.u32 %v500, 7
        %v502 = vsub.s32 1, %v501
        %v503 = vrot.slane %v494, %v502
        %506 = vmatprep.subr.mxu0 %v462
        %507 = vmatpush1.msra.mxu0 %v461
        %508 = vmatprep.subr.mxu0 %v464
        %509 = vmatpush1.msra.mxu0 %v463
        %510 = vmatprep.subr.mxu0 %v466
        %511 = vmatpush1.msra.mxu0 %v465
        %512 = vmatprep.subr.mxu0 %v468
        %513 = vmatpush1.msra.mxu0 %v467
        %514 = vmatprep.subr.mxu0 %v470
        %515 = vmatpush1.msra.mxu0 %v469
        %516 = vmatprep.subr.mxu0 %v472
        %517 = vmatpush1.msra.mxu0 %v471
        %518 = vmatprep.subr.mxu0 %v474
        %519 = vmatpush1.msra.mxu0 %v473
        %520 = vmatprep.subr.mxu0 %v476
        %521 = vmatpush1.msra.mxu0 %v475
        %522 = vmatprep.subr.mxu0 %v478
        %523 = vmatpush1.msra.mxu0 %v477
        %524 = vmatprep.subr.mxu0 %v480
        %525 = vmatpush1.msra.mxu0 %v479
        %526 = vmatprep.subr.mxu0 %v482
        %527 = vmatpush1.msra.mxu0 %v481
        %528 = vmatprep.subr.mxu0 %v484
        %529 = vmatpush1.msra.mxu0 %v483
        %530 = vmatprep.subr.mxu0 %v486
        %531 = vmatpush1.msra.mxu0 %v485
        %532 = vmatprep.subr.mxu0 %v488
        %533 = vmatpush1.msra.mxu0 %v487
        %534 = vmatprep.subr.mxu0 %v490
        %535 = vmatpush1.msra.mxu0 %v489
        %536 = vmatprep.subr.mxu0 %v492
        %537 = vmatpush1.msra.mxu0 %v491
        %538 = vmatprep.subr.mxu0 0.0
        %539 = vmatpush1.msra.mxu0 0.0
        %540 = vmatprep.subr.mxu0 0.0
        %541 = vmatpush1.msra.mxu0 0.0
        %542 = vmatprep.subr.mxu0 0.0
        %543 = vmatpush1.msra.mxu0 0.0
        %544 = vmatprep.subr.mxu0 0.0
        %545 = vmatpush1.msra.mxu0 0.0
        %546 = vmatprep.subr.mxu0 0.0
        %547 = vmatpush1.msra.mxu0 0.0
        %548 = vmatprep.subr.mxu0 0.0
        %549 = vmatpush1.msra.mxu0 0.0
        %550 = vmatprep.subr.mxu0 0.0
        %551 = vmatpush1.msra.mxu0 0.0
        %552 = vmatprep.subr.mxu0 0.0
        %553 = vmatpush1.msra.mxu0 0.0
        %554 = vmatprep.subr.mxu0 0.0
        %555 = vmatpush1.msra.mxu0 0.0
        %556 = vmatprep.subr.mxu0 0.0
        %557 = vmatpush1.msra.mxu0 0.0
        %558 = vmatprep.subr.mxu0 0.0
        %559 = vmatpush1.msra.mxu0 0.0
        %560 = vmatprep.subr.mxu0 0.0
        %561 = vmatpush1.msra.mxu0 0.0
        %562 = vmatprep.subr.mxu0 0.0
        %563 = vmatpush1.msra.mxu0 0.0
        %564 = vmatprep.subr.mxu0 0.0
        %565 = vmatpush1.msra.mxu0 0.0
        %566 = vmatprep.subr.mxu0 0.0
        %567 = vmatpush1.msra.mxu0 0.0
        %568 = vmatprep.subr.mxu0 0.0
        %569 = vmatpush1.msra.mxu0 0.0
        %570 = vmatprep.mubr.f32.mxu0 0.0
        %571 = vmatmul.mubr.f32.gmra.mrb[0].mxu0 %v460
        %v572 = vpop.f32.mrb[0].mxu0
        %v573 = vadd.f32 %v499, %v572
        %v574 = vpop.f32.mrb[0].mxu0
        %v575 = vadd.f32 %v503, %v574
        %576 = vdwg.mxu0
        %v577 = vmax.f32 %v573, 0.0
        %v578 = vmax.f32 %v575, 0.0
        %v579 = vld [vmem:[%s3] sm:$0xff]
        %v580 = vld [vmem:[%s3 + $0x8] sm:$0xff]
        %v581 = vld [vmem:[%s3 + $0x10] sm:$0xff]
        %v582 = vld [vmem:[%s3 + $0x18] sm:$0xff]
        %v583 = vld [vmem:[%s3 + $0x20] sm:$0xff]
        %v584 = vld [vmem:[%s3 + $0x28] sm:$0xff]
        %v585 = vld [vmem:[%s3 + $0x30] sm:$0xff]
        %v586 = vld [vmem:[%s3 + $0x38] sm:$0xff]
        %v587 = vld [vmem:[%s3 + $0x40] sm:$0xff]
        %v588 = vld [vmem:[%s3 + $0x48] sm:$0xff]
        %v589 = vld [vmem:[%s3 + $0x50] sm:$0xff]
        %v590 = vld [vmem:[%s3 + $0x58] sm:$0xff]
        %v591 = vld [vmem:[%s3 + $0x60] sm:$0xff]
        %v592 = vld [vmem:[%s3 + $0x68] sm:$0xff]
        %v593 = vld [vmem:[%s3 + $0x70] sm:$0xff]
        %v594 = vld [vmem:[%s3 + $0x78] sm:$0xff]
        %v595 = vld [vmem:[%s3 + $0x80] sm:$0xff]
        %v596 = vld [vmem:[%s3 + $0x88] sm:$0xff]
        %v597 = vld [vmem:[%s3 + $0x90] sm:$0xff]
        %v598 = vld [vmem:[%s3 + $0x98] sm:$0xff]
        %v599 = vld [vmem:[%s3 + $0xa0] sm:$0xff]
        %v600 = vld [vmem:[%s3 + $0xa8] sm:$0xff]
        %v601 = vld [vmem:[%s3 + $0xb0] sm:$0xff]
        %v602 = vld [vmem:[%s3 + $0xb8] sm:$0xff]
        %v603 = vld [vmem:[%s3 + $0xc0] sm:$0xff]
        %v604 = vld [vmem:[%s3 + $0xc8] sm:$0xff]
        %v605 = vld [vmem:[%s3 + $0xd0] sm:$0xff]
        %v606 = vld [vmem:[%s3 + $0xd8] sm:$0xff]
        %v607 = vld [vmem:[%s3 + $0xe0] sm:$0xff]
        %v608 = vld [vmem:[%s3 + $0xe8] sm:$0xff]
        %v609 = vld [vmem:[%s3 + $0xf0] sm:$0xff]
        %v610 = vld [vmem:[%s3 + $0xf8] sm:$0xff]
        %v611 = vld [vmem:[%s3 + $0x100] sm:$0xff]
        %v612 = vld [vmem:[%s3 + $0x108] sm:$0xff]
        %v613 = vld [vmem:[%s3 + $0x110] sm:$0xff]
        %v614 = vld [vmem:[%s3 + $0x118] sm:$0xff]
        %v615 = vld [vmem:[%s3 + $0x120] sm:$0xff]
        %v616 = vld [vmem:[%s3 + $0x128] sm:$0xff]
        %v617 = vld [vmem:[%s3 + $0x130] sm:$0xff]
        %v618 = vld [vmem:[%s3 + $0x138] sm:$0xff]
        %v619 = vld [vmem:[%s3 + $0x140] sm:$0xff]
        %v620 = vld [vmem:[%s3 + $0x148] sm:$0xff]
        %v621 = vld [vmem:[%s3 + $0x150] sm:$0xff]
        %v622 = vld [vmem:[%s3 + $0x158] sm:$0xff]
        %v623 = vld [vmem:[%s3 + $0x160] sm:$0xff]
        %v624 = vld [vmem:[%s3 + $0x168] sm:$0xff]
        %v625 = vld [vmem:[%s3 + $0x170] sm:$0xff]
        %v626 = vld [vmem:[%s3 + $0x178] sm:$0xff]
        %v627 = vld [vmem:[%s3 + $0x180] sm:$0xff]
        %v628 = vld [vmem:[%s3 + $0x188] sm:$0xff]
        %v629 = vld [vmem:[%s3 + $0x190] sm:$0xff]
        %v630 = vld [vmem:[%s3 + $0x198] sm:$0xff]
        %v631 = vld [vmem:[%s3 + $0x1a0] sm:$0xff]
        %v632 = vld [vmem:[%s3 + $0x1a8] sm:$0xff]
        %v633 = vld [vmem:[%s3 + $0x1b0] sm:$0xff]
        %v634 = vld [vmem:[%s3 + $0x1b8] sm:$0xff]
        %v635 = vld [vmem:[%s3 + $0x1c0] sm:$0xff]
        %v636 = vld [vmem:[%s3 + $0x1c8] sm:$0xff]
        %v637 = vld [vmem:[%s3 + $0x1d0] sm:$0xff]
        %v638 = vld [vmem:[%s3 + $0x1d8] sm:$0xff]
        %v639 = vld [vmem:[%s3 + $0x1e0] sm:$0xff]
        %v640 = vld [vmem:[%s3 + $0x1e8] sm:$0xff]
        %v641 = vld [vmem:[%s3 + $0x1f0] sm:$0xff]
        %v642 = vld [vmem:[%s3 + $0x1f8] sm:$0xff]
        %v643 = vld [vmem:[%s3 + $0x200] sm:$0xff]
        %v644 = vld [vmem:[%s3 + $0x208] sm:$0xff]
        %v645 = vld [vmem:[%s3 + $0x210] sm:$0xff]
        %v646 = vld [vmem:[%s3 + $0x218] sm:$0xff]
        %v647 = vld [vmem:[%s3 + $0x220] sm:$0xff]
        %v648 = vld [vmem:[%s3 + $0x228] sm:$0xff]
        %v649 = vld [vmem:[%s3 + $0x230] sm:$0xff]
        %v650 = vld [vmem:[%s3 + $0x238] sm:$0xff]
        %s651 = scalar_lea.vmem %s6, 2
        %v652 = vld [vmem:[%s651] ss:$8 sm:$0x7]
        %v654 = vlaneseq
        %v655 = vshrl.u32 %v654, 7
        %v656 = vsub.s32 0, %v655
        %v657 = vrot.slane %v652, %v656
        %v658 = vlaneseq
        %v659 = vshrl.u32 %v658, 7
        %v660 = vsub.s32 1, %v659
        %v661 = vrot.slane %v652, %v660
        %v662 = vlaneseq
        %v663 = vshrl.u32 %v662, 7
        %v664 = vsub.s32 2, %v663
        %v665 = vrot.slane %v652, %v664
        %vm669 = vcmask 523264
        %v671 = vsel %vm669, %v578, 0
        %673 = vmatprep.subr.mxu0 %v580
        %674 = vmatpush1.msra.mxu0 %v579
        %675 = vmatprep.subr.mxu0 %v583
        %676 = vmatpush1.msra.mxu0 %v582
        %677 = vmatprep.subr.mxu0 %v586
        %678 = vmatpush1.msra.mxu0 %v585
        %679 = vmatprep.subr.mxu0 %v589
        %680 = vmatpush1.msra.mxu0 %v588
        %681 = vmatprep.subr.mxu0 %v592
        %682 = vmatpush1.msra.mxu0 %v591
        %683 = vmatprep.subr.mxu0 %v595
        %684 = vmatpush1.msra.mxu0 %v594
        %685 = vmatprep.subr.mxu0 %v598
        %686 = vmatpush1.msra.mxu0 %v597
        %687 = vmatprep.subr.mxu0 %v601
        %688 = vmatpush1.msra.mxu0 %v600
        %689 = vmatprep.subr.mxu0 %v604
        %690 = vmatpush1.msra.mxu0 %v603
        %691 = vmatprep.subr.mxu0 %v607
        %692 = vmatpush1.msra.mxu0 %v606
        %693 = vmatprep.subr.mxu0 %v610
        %694 = vmatpush1.msra.mxu0 %v609
        %695 = vmatprep.subr.mxu0 %v613
        %696 = vmatpush1.msra.mxu0 %v612
        %697 = vmatprep.subr.mxu0 %v616
        %698 = vmatpush1.msra.mxu0 %v615
        %699 = vmatprep.subr.mxu0 %v619
        %700 = vmatpush1.msra.mxu0 %v618
        %701 = vmatprep.subr.mxu0 %v622
        %702 = vmatpush1.msra.mxu0 %v621
        %703 = vmatprep.subr.mxu0 %v625
        %704 = vmatpush1.msra.mxu0 %v624
        %705 = vmatprep.subr.mxu0 %v628
        %706 = vmatpush1.msra.mxu0 %v627
        %707 = vmatprep.subr.mxu0 %v631
        %708 = vmatpush1.msra.mxu0 %v630
        %709 = vmatprep.subr.mxu0 %v634
        %710 = vmatpush1.msra.mxu0 %v633
        %711 = vmatprep.subr.mxu0 %v637
        %712 = vmatpush1.msra.mxu0 %v636
        %713 = vmatprep.subr.mxu0 %v640
        %714 = vmatpush1.msra.mxu0 %v639
        %715 = vmatprep.subr.mxu0 %v643
        %716 = vmatpush1.msra.mxu0 %v642
        %717 = vmatprep.subr.mxu0 %v646
        %718 = vmatpush1.msra.mxu0 %v645
        %719 = vmatprep.subr.mxu0 %v649
        %720 = vmatpush1.msra.mxu0 %v648
        %721 = vmatprep.subr.mxu0 0.0
        %722 = vmatpush1.msra.mxu0 0.0
        %723 = vmatprep.subr.mxu0 0.0
        %724 = vmatpush1.msra.mxu0 0.0
        %725 = vmatprep.subr.mxu0 0.0
        %726 = vmatpush1.msra.mxu0 0.0
        %727 = vmatprep.subr.mxu0 0.0
        %728 = vmatpush1.msra.mxu0 0.0
        %729 = vmatprep.subr.mxu0 0.0
        %730 = vmatpush1.msra.mxu0 0.0
        %731 = vmatprep.subr.mxu0 0.0
        %732 = vmatpush1.msra.mxu0 0.0
        %733 = vmatprep.subr.mxu0 0.0
        %734 = vmatpush1.msra.mxu0 0.0
        %735 = vmatprep.subr.mxu0 0.0
        %736 = vmatpush1.msra.mxu0 0.0
        %737 = vmatprep.mubr.f32.mxu0 %v671
        %738 = vmatmul.mubr.f32.gmra.mrb[0].mxu0 %v577
        %v739 = vpop.f32.mrb[0].mxu0
        %v740 = vadd.f32 %v657, %v739
        %v741 = vpop.f32.mrb[0].mxu0
        %v742 = vadd.f32 %v661, %v741
        %743 = vdwg.mxu0
        %744 = vmatprep.subr.mxu0 0.0
        %745 = vmatpush1.msra.mxu0 %v581
        %746 = vmatprep.subr.mxu0 0.0
        %747 = vmatpush1.msra.mxu0 %v584
        %748 = vmatprep.subr.mxu0 0.0
        %749 = vmatpush1.msra.mxu0 %v587
        %750 = vmatprep.subr.mxu0 0.0
        %751 = vmatpush1.msra.mxu0 %v590
        %752 = vmatprep.subr.mxu0 0.0
        %753 = vmatpush1.msra.mxu0 %v593
        %754 = vmatprep.subr.mxu0 0.0
        %755 = vmatpush1.msra.mxu0 %v596
        %756 = vmatprep.subr.mxu0 0.0
        %757 = vmatpush1.msra.mxu0 %v599
        %758 = vmatprep.subr.mxu0 0.0
        %759 = vmatpush1.msra.mxu0 %v602
        %760 = vmatprep.subr.mxu0 0.0
        %761 = vmatpush1.msra.mxu0 %v605
        %762 = vmatprep.subr.mxu0 0.0
        %763 = vmatpush1.msra.mxu0 %v608
        %764 = vmatprep.subr.mxu0 0.0
        %765 = vmatpush1.msra.mxu0 %v611
        %766 = vmatprep.subr.mxu0 0.0
        %767 = vmatpush1.msra.mxu0 %v614
        %768 = vmatprep.subr.mxu0 0.0
        %769 = vmatpush1.msra.mxu0 %v617
        %770 = vmatprep.subr.mxu0 0.0
        %771 = vmatpush1.msra.mxu0 %v620
        %772 = vmatprep.subr.mxu0 0.0
        %773 = vmatpush1.msra.mxu0 %v623
        %774 = vmatprep.subr.mxu0 0.0
        %775 = vmatpush1.msra.mxu0 %v626
        %776 = vmatprep.subr.mxu0 0.0
        %777 = vmatpush1.msra.mxu0 %v629
        %778 = vmatprep.subr.mxu0 0.0
        %779 = vmatpush1.msra.mxu0 %v632
        %780 = vmatprep.subr.mxu0 0.0
        %781 = vmatpush1.msra.mxu0 %v635
        %782 = vmatprep.subr.mxu0 0.0
        %783 = vmatpush1.msra.mxu0 %v638
        %784 = vmatprep.subr.mxu0 0.0
        %785 = vmatpush1.msra.mxu0 %v641
        %786 = vmatprep.subr.mxu0 0.0
        %787 = vmatpush1.msra.mxu0 %v644
        %788 = vmatprep.subr.mxu0 0.0
        %789 = vmatpush1.msra.mxu0 %v647
        %790 = vmatprep.subr.mxu0 0.0
        %791 = vmatpush1.msra.mxu0 %v650
        %792 = vmatprep.subr.mxu0 0.0
        %793 = vmatpush1.msra.mxu0 0.0
        %794 = vmatprep.subr.mxu0 0.0
        %795 = vmatpush1.msra.mxu0 0.0
        %796 = vmatprep.subr.mxu0 0.0
        %797 = vmatpush1.msra.mxu0 0.0
        %798 = vmatprep.subr.mxu0 0.0
        %799 = vmatpush1.msra.mxu0 0.0
        %800 = vmatprep.subr.mxu0 0.0
        %801 = vmatpush1.msra.mxu0 0.0
        %802 = vmatprep.subr.mxu0 0.0
        %803 = vmatpush1.msra.mxu0 0.0
        %804 = vmatprep.subr.mxu0 0.0
        %805 = vmatpush1.msra.mxu0 0.0
        %806 = vmatprep.subr.mxu0 0.0
        %807 = vmatpush1.msra.mxu0 0.0
        %808 = vmatprep.mubr.f32.mxu0 %v671
        %809 = vmatmul.mubr.f32.gmra.mrb[0].mxu0 %v577
        %v810 = vpop.f32.mrb[0].mxu0
        %v811 = vadd.f32 %v665, %v810
        %v812 = vpop.f32.mrb[0].mxu0
        %813 = vdwg.mxu0
        %v814 = vmul.f32 %v740, 0.35355338
        %815 = vxpose.xlu0.b32.start [1/16] %v742, 128
        %816 = vxpose.xlu0.b32.cont [2/16] 0.0, 128
        %817 = vxpose.xlu0.b32.cont [3/16] 0.0, 128
        %818 = vxpose.xlu0.b32.cont [4/16] 0.0, 128
        %819 = vxpose.xlu0.b32.cont [5/16] 0.0, 128
        %820 = vxpose.xlu0.b32.cont [6/16] 0.0, 128
        %821 = vxpose.xlu0.b32.cont [7/16] 0.0, 128
        %822 = vxpose.xlu0.b32.cont [8/16] 0.0, 128
        %823 = vxpose.xlu0.b32.cont [9/16] 0.0, 128
        %824 = vxpose.xlu0.b32.cont [10/16] 0.0, 128
        %825 = vxpose.xlu0.b32.cont [11/16] 0.0, 128
        %826 = vxpose.xlu0.b32.cont [12/16] 0.0, 128
        %827 = vxpose.xlu0.b32.cont [13/16] 0.0, 128
        %828 = vxpose.xlu0.b32.cont [14/16] 0.0, 128
        %829 = vxpose.xlu0.b32.cont [15/16] 0.0, 128
        %830 = vxpose.xlu0.b32.end [16/16] 0.0, 128
        %v831 = vpop.trf.xlu0
        %v832 = vpop.trf.xlu0
        %v833 = vpop.trf.xlu0
        %v834 = vpop.trf.xlu0
        %v835 = vpop.trf.xlu0
        %v836 = vpop.trf.xlu0
        %v837 = vpop.trf.xlu0
        %v838 = vpop.trf.xlu0
        %v839 = vpop.trf.xlu0
        %v840 = vpop.trf.xlu0
        %v841 = vpop.trf.xlu0
        %v842 = vpop.trf.xlu0
        %v843 = vpop.trf.xlu0
        %v844 = vpop.trf.xlu0
        %v845 = vpop.trf.xlu0
        %v846 = vpop.trf.xlu0
        %863 = vrot.lane.b32.xlu0 %v831, 8
        %v864 = vpop.permute.xlu0 %863
        %865 = vrot.lane.b32.xlu0 %v832, 8
        %v866 = vpop.permute.xlu0 %865
        %867 = vrot.lane.b32.xlu0 %v833, 8
        %v868 = vpop.permute.xlu0 %867
        %869 = vrot.lane.b32.xlu0 %v834, 8
        %v870 = vpop.permute.xlu0 %869
        %871 = vrot.lane.b32.xlu0 %v835, 8
        %v872 = vpop.permute.xlu0 %871
        %873 = vrot.lane.b32.xlu0 %v836, 8
        %v874 = vpop.permute.xlu0 %873
        %875 = vrot.lane.b32.xlu0 %v837, 8
        %v876 = vpop.permute.xlu0 %875
        %877 = vrot.lane.b32.xlu0 %v838, 8
        %v878 = vpop.permute.xlu0 %877
        %879 = vrot.lane.b32.xlu0 %v839, 8
        %v880 = vpop.permute.xlu0 %879
        %881 = vrot.lane.b32.xlu0 %v840, 8
        %v882 = vpop.permute.xlu0 %881
        %883 = vrot.lane.b32.xlu0 %v841, 8
        %v884 = vpop.permute.xlu0 %883
        %885 = vrot.lane.b32.xlu0 %v842, 8
        %v886 = vpop.permute.xlu0 %885
        %887 = vrot.lane.b32.xlu0 %v843, 8
        %v888 = vpop.permute.xlu0 %887
        %889 = vrot.lane.b32.xlu0 %v844, 8
        %v890 = vpop.permute.xlu0 %889
        %891 = vrot.lane.b32.xlu0 %v845, 8
        %v892 = vpop.permute.xlu0 %891
        %893 = vrot.lane.b32.xlu0 %v846, 8
        %v894 = vpop.permute.xlu0 %893
        %911 = vrot.lane.b32.xlu0 %v831, 16
        %v912 = vpop.permute.xlu0 %911
        %913 = vrot.lane.b32.xlu0 %v832, 16
        %v914 = vpop.permute.xlu0 %913
        %915 = vrot.lane.b32.xlu0 %v833, 16
        %v916 = vpop.permute.xlu0 %915
        %917 = vrot.lane.b32.xlu0 %v834, 16
        %v918 = vpop.permute.xlu0 %917
        %919 = vrot.lane.b32.xlu0 %v835, 16
        %v920 = vpop.permute.xlu0 %919
        %921 = vrot.lane.b32.xlu0 %v836, 16
        %v922 = vpop.permute.xlu0 %921
        %923 = vrot.lane.b32.xlu0 %v837, 16
        %v924 = vpop.permute.xlu0 %923
        %925 = vrot.lane.b32.xlu0 %v838, 16
        %v926 = vpop.permute.xlu0 %925
        %927 = vrot.lane.b32.xlu0 %v839, 16
        %v928 = vpop.permute.xlu0 %927
        %929 = vrot.lane.b32.xlu0 %v840, 16
        %v930 = vpop.permute.xlu0 %929
        %931 = vrot.lane.b32.xlu0 %v841, 16
        %v932 = vpop.permute.xlu0 %931
        %933 = vrot.lane.b32.xlu0 %v842, 16
        %v934 = vpop.permute.xlu0 %933
        %935 = vrot.lane.b32.xlu0 %v843, 16
        %v936 = vpop.permute.xlu0 %935
        %937 = vrot.lane.b32.xlu0 %v844, 16
        %v938 = vpop.permute.xlu0 %937
        %939 = vrot.lane.b32.xlu0 %v845, 16
        %v940 = vpop.permute.xlu0 %939
        %941 = vrot.lane.b32.xlu0 %v846, 16
        %v942 = vpop.permute.xlu0 %941
        %959 = vrot.lane.b32.xlu0 %v831, 24
        %v960 = vpop.permute.xlu0 %959
        %961 = vrot.lane.b32.xlu0 %v832, 24
        %v962 = vpop.permute.xlu0 %961
        %963 = vrot.lane.b32.xlu0 %v833, 24
        %v964 = vpop.permute.xlu0 %963
        %965 = vrot.lane.b32.xlu0 %v834, 24
        %v966 = vpop.permute.xlu0 %965
        %967 = vrot.lane.b32.xlu0 %v835, 24
        %v968 = vpop.permute.xlu0 %967
        %969 = vrot.lane.b32.xlu0 %v836, 24
        %v970 = vpop.permute.xlu0 %969
        %971 = vrot.lane.b32.xlu0 %v837, 24
        %v972 = vpop.permute.xlu0 %971
        %973 = vrot.lane.b32.xlu0 %v838, 24
        %v974 = vpop.permute.xlu0 %973
        %975 = vrot.lane.b32.xlu0 %v839, 24
        %v976 = vpop.permute.xlu0 %975
        %977 = vrot.lane.b32.xlu0 %v840, 24
        %v978 = vpop.permute.xlu0 %977
        %979 = vrot.lane.b32.xlu0 %v841, 24
        %v980 = vpop.permute.xlu0 %979
        %981 = vrot.lane.b32.xlu0 %v842, 24
        %v982 = vpop.permute.xlu0 %981
        %983 = vrot.lane.b32.xlu0 %v843, 24
        %v984 = vpop.permute.xlu0 %983
        %985 = vrot.lane.b32.xlu0 %v844, 24
        %v986 = vpop.permute.xlu0 %985
        %987 = vrot.lane.b32.xlu0 %v845, 24
        %v988 = vpop.permute.xlu0 %987
        %989 = vrot.lane.b32.xlu0 %v846, 24
        %v990 = vpop.permute.xlu0 %989
        %1007 = vrot.lane.b32.xlu0 %v831, 32
        %v1008 = vpop.permute.xlu0 %1007
        %1009 = vrot.lane.b32.xlu0 %v832, 32
        %v1010 = vpop.permute.xlu0 %1009
        %1011 = vrot.lane.b32.xlu0 %v833, 32
        %v1012 = vpop.permute.xlu0 %1011
        %1013 = vrot.lane.b32.xlu0 %v834, 32
        %v1014 = vpop.permute.xlu0 %1013
        %1015 = vrot.lane.b32.xlu0 %v835, 32
        %v1016 = vpop.permute.xlu0 %1015
        %1017 = vrot.lane.b32.xlu0 %v836, 32
        %v1018 = vpop.permute.xlu0 %1017
        %1019 = vrot.lane.b32.xlu0 %v837, 32
        %v1020 = vpop.permute.xlu0 %1019
        %1021 = vrot.lane.b32.xlu0 %v838, 32
        %v1022 = vpop.permute.xlu0 %1021
        %1023 = vrot.lane.b32.xlu0 %v839, 32
        %v1024 = vpop.permute.xlu0 %1023
        %1025 = vrot.lane.b32.xlu0 %v840, 32
        %v1026 = vpop.permute.xlu0 %1025
        %1027 = vrot.lane.b32.xlu0 %v841, 32
        %v1028 = vpop.permute.xlu0 %1027
        %1029 = vrot.lane.b32.xlu0 %v842, 32
        %v1030 = vpop.permute.xlu0 %1029
        %1031 = vrot.lane.b32.xlu0 %v843, 32
        %v1032 = vpop.permute.xlu0 %1031
        %1033 = vrot.lane.b32.xlu0 %v844, 32
        %v1034 = vpop.permute.xlu0 %1033
        %1035 = vrot.lane.b32.xlu0 %v845, 32
        %v1036 = vpop.permute.xlu0 %1035
        %1037 = vrot.lane.b32.xlu0 %v846, 32
        %v1038 = vpop.permute.xlu0 %1037
        %1055 = vrot.lane.b32.xlu0 %v831, 40
        %v1056 = vpop.permute.xlu0 %1055
        %1057 = vrot.lane.b32.xlu0 %v832, 40
        %v1058 = vpop.permute.xlu0 %1057
        %1059 = vrot.lane.b32.xlu0 %v833, 40
        %v1060 = vpop.permute.xlu0 %1059
        %1061 = vrot.lane.b32.xlu0 %v834, 40
        %v1062 = vpop.permute.xlu0 %1061
        %1063 = vrot.lane.b32.xlu0 %v835, 40
        %v1064 = vpop.permute.xlu0 %1063
        %1065 = vrot.lane.b32.xlu0 %v836, 40
        %v1066 = vpop.permute.xlu0 %1065
        %1067 = vrot.lane.b32.xlu0 %v837, 40
        %v1068 = vpop.permute.xlu0 %1067
        %1069 = vrot.lane.b32.xlu0 %v838, 40
        %v1070 = vpop.permute.xlu0 %1069
        %1071 = vrot.lane.b32.xlu0 %v839, 40
        %v1072 = vpop.permute.xlu0 %1071
        %1073 = vrot.lane.b32.xlu0 %v840, 40
        %v1074 = vpop.permute.xlu0 %1073
        %1075 = vrot.lane.b32.xlu0 %v841, 40
        %v1076 = vpop.permute.xlu0 %1075
        %1077 = vrot.lane.b32.xlu0 %v842, 40
        %v1078 = vpop.permute.xlu0 %1077
        %1079 = vrot.lane.b32.xlu0 %v843, 40
        %v1080 = vpop.permute.xlu0 %1079
        %1081 = vrot.lane.b32.xlu0 %v844, 40
        %v1082 = vpop.permute.xlu0 %1081
        %1083 = vrot.lane.b32.xlu0 %v845, 40
        %v1084 = vpop.permute.xlu0 %1083
        %1085 = vrot.lane.b32.xlu0 %v846, 40
        %v1086 = vpop.permute.xlu0 %1085
        %1103 = vrot.lane.b32.xlu0 %v831, 48
        %v1104 = vpop.permute.xlu0 %1103
        %1105 = vrot.lane.b32.xlu0 %v832, 48
        %v1106 = vpop.permute.xlu0 %1105
        %1107 = vrot.lane.b32.xlu0 %v833, 48
        %v1108 = vpop.permute.xlu0 %1107
        %1109 = vrot.lane.b32.xlu0 %v834, 48
        %v1110 = vpop.permute.xlu0 %1109
        %1111 = vrot.lane.b32.xlu0 %v835, 48
        %v1112 = vpop.permute.xlu0 %1111
        %1113 = vrot.lane.b32.xlu0 %v836, 48
        %v1114 = vpop.permute.xlu0 %1113
        %1115 = vrot.lane.b32.xlu0 %v837, 48
        %v1116 = vpop.permute.xlu0 %1115
        %1117 = vrot.lane.b32.xlu0 %v838, 48
        %v1118 = vpop.permute.xlu0 %1117
        %1119 = vrot.lane.b32.xlu0 %v839, 48
        %v1120 = vpop.permute.xlu0 %1119
        %1121 = vrot.lane.b32.xlu0 %v840, 48
        %v1122 = vpop.permute.xlu0 %1121
        %1123 = vrot.lane.b32.xlu0 %v841, 48
        %v1124 = vpop.permute.xlu0 %1123
        %1125 = vrot.lane.b32.xlu0 %v842, 48
        %v1126 = vpop.permute.xlu0 %1125
        %1127 = vrot.lane.b32.xlu0 %v843, 48
        %v1128 = vpop.permute.xlu0 %1127
        %1129 = vrot.lane.b32.xlu0 %v844, 48
        %v1130 = vpop.permute.xlu0 %1129
        %1131 = vrot.lane.b32.xlu0 %v845, 48
        %v1132 = vpop.permute.xlu0 %1131
        %1133 = vrot.lane.b32.xlu0 %v846, 48
        %v1134 = vpop.permute.xlu0 %1133
        %1151 = vrot.lane.b32.xlu0 %v831, 56
        %v1152 = vpop.permute.xlu0 %1151
        %1153 = vrot.lane.b32.xlu0 %v832, 56
        %v1154 = vpop.permute.xlu0 %1153
        %1155 = vrot.lane.b32.xlu0 %v833, 56
        %v1156 = vpop.permute.xlu0 %1155
        %1157 = vrot.lane.b32.xlu0 %v834, 56
        %v1158 = vpop.permute.xlu0 %1157
        %1159 = vrot.lane.b32.xlu0 %v835, 56
        %v1160 = vpop.permute.xlu0 %1159
        %1161 = vrot.lane.b32.xlu0 %v836, 56
        %v1162 = vpop.permute.xlu0 %1161
        %1163 = vrot.lane.b32.xlu0 %v837, 56
        %v1164 = vpop.permute.xlu0 %1163
        %1165 = vrot.lane.b32.xlu0 %v838, 56
        %v1166 = vpop.permute.xlu0 %1165
        %1167 = vrot.lane.b32.xlu0 %v839, 56
        %v1168 = vpop.permute.xlu0 %1167
        %1169 = vrot.lane.b32.xlu0 %v840, 56
        %v1170 = vpop.permute.xlu0 %1169
        %1171 = vrot.lane.b32.xlu0 %v841, 56
        %v1172 = vpop.permute.xlu0 %1171
        %1173 = vrot.lane.b32.xlu0 %v842, 56
        %v1174 = vpop.permute.xlu0 %1173
        %1175 = vrot.lane.b32.xlu0 %v843, 56
        %v1176 = vpop.permute.xlu0 %1175
        %1177 = vrot.lane.b32.xlu0 %v844, 56
        %v1178 = vpop.permute.xlu0 %1177
        %1179 = vrot.lane.b32.xlu0 %v845, 56
        %v1180 = vpop.permute.xlu0 %1179
        %1181 = vrot.lane.b32.xlu0 %v846, 56
        %v1182 = vpop.permute.xlu0 %1181
        %vm1199 = vcmask 64512
        %v1200 = vsel %vm1199, %v831, %v864
        %v1201 = vsel %vm1199, %v832, %v866
        %v1202 = vsel %vm1199, %v833, %v868
        %v1203 = vsel %vm1199, %v834, %v870
        %v1204 = vsel %vm1199, %v835, %v872
        %v1205 = vsel %vm1199, %v836, %v874
        %v1206 = vsel %vm1199, %v837, %v876
        %v1207 = vsel %vm1199, %v838, %v878
        %v1208 = vsel %vm1199, %v839, %v880
        %v1209 = vsel %vm1199, %v840, %v882
        %v1210 = vsel %vm1199, %v841, %v884
        %v1211 = vsel %vm1199, %v842, %v886
        %v1212 = vsel %vm1199, %v843, %v888
        %v1213 = vsel %vm1199, %v844, %v890
        %v1214 = vsel %vm1199, %v845, %v892
        %v1215 = vsel %vm1199, %v846, %v894
        %vm1216 = vcmask 130048
        %v1217 = vsel %vm1216, %v1200, %v912
        %v1218 = vsel %vm1216, %v1201, %v914
        %v1219 = vsel %vm1216, %v1202, %v916
        %v1220 = vsel %vm1216, %v1203, %v918
        %v1221 = vsel %vm1216, %v1204, %v920
        %v1222 = vsel %vm1216, %v1205, %v922
        %v1223 = vsel %vm1216, %v1206, %v924
        %v1224 = vsel %vm1216, %v1207, %v926
        %v1225 = vsel %vm1216, %v1208, %v928
        %v1226 = vsel %vm1216, %v1209, %v930
        %v1227 = vsel %vm1216, %v1210, %v932
        %v1228 = vsel %vm1216, %v1211, %v934
        %v1229 = vsel %vm1216, %v1212, %v936
        %v1230 = vsel %vm1216, %v1213, %v938
        %v1231 = vsel %vm1216, %v1214, %v940
        %v1232 = vsel %vm1216, %v1215, %v942
        %vm1233 = vcmask 195584
        %v1234 = vsel %vm1233, %v1217, %v960
        %v1235 = vsel %vm1233, %v1218, %v962
        %v1236 = vsel %vm1233, %v1219, %v964
        %v1237 = vsel %vm1233, %v1220, %v966
        %v1238 = vsel %vm1233, %v1221, %v968
        %v1239 = vsel %vm1233, %v1222, %v970
        %v1240 = vsel %vm1233, %v1223, %v972
        %v1241 = vsel %vm1233, %v1224, %v974
        %v1242 = vsel %vm1233, %v1225, %v976
        %v1243 = vsel %vm1233, %v1226, %v978
        %v1244 = vsel %vm1233, %v1227, %v980
        %v1245 = vsel %vm1233, %v1228, %v982
        %v1246 = vsel %vm1233, %v1229, %v984
        %v1247 = vsel %vm1233, %v1230, %v986
        %v1248 = vsel %vm1233, %v1231, %v988
        %v1249 = vsel %vm1233, %v1232, %v990
        %vm1250 = vcmask 261120
        %v1251 = vsel %vm1250, %v1234, %v1008
        %v1252 = vsel %vm1250, %v1235, %v1010
        %v1253 = vsel %vm1250, %v1236, %v1012
        %v1254 = vsel %vm1250, %v1237, %v1014
        %v1255 = vsel %vm1250, %v1238, %v1016
        %v1256 = vsel %vm1250, %v1239, %v1018
        %v1257 = vsel %vm1250, %v1240, %v1020
        %v1258 = vsel %vm1250, %v1241, %v1022
        %v1259 = vsel %vm1250, %v1242, %v1024
        %v1260 = vsel %vm1250, %v1243, %v1026
        %v1261 = vsel %vm1250, %v1244, %v1028
        %v1262 = vsel %vm1250, %v1245, %v1030
        %v1263 = vsel %vm1250, %v1246, %v1032
        %v1264 = vsel %vm1250, %v1247, %v1034
        %v1265 = vsel %vm1250, %v1248, %v1036
        %v1266 = vsel %vm1250, %v1249, %v1038
        %vm1267 = vcmask 326656
        %v1268 = vsel %vm1267, %v1251, %v1056
        %v1269 = vsel %vm1267, %v1252, %v1058
        %v1270 = vsel %vm1267, %v1253, %v1060
        %v1271 = vsel %vm1267, %v1254, %v1062
        %v1272 = vsel %vm1267, %v1255, %v1064
        %v1273 = vsel %vm1267, %v1256, %v1066
        %v1274 = vsel %vm1267, %v1257, %v1068
        %v1275 = vsel %vm1267, %v1258, %v1070
        %v1276 = vsel %vm1267, %v1259, %v1072
        %v1277 = vsel %vm1267, %v1260, %v1074
        %v1278 = vsel %vm1267, %v1261, %v1076
        %v1279 = vsel %vm1267, %v1262, %v1078
        %v1280 = vsel %vm1267, %v1263, %v1080
        %v1281 = vsel %vm1267, %v1264, %v1082
        %v1282 = vsel %vm1267, %v1265, %v1084
        %v1283 = vsel %vm1267, %v1266, %v1086
        %vm1284 = vcmask 392192
        %v1285 = vsel %vm1284, %v1268, %v1104
        %v1286 = vsel %vm1284, %v1269, %v1106
        %v1287 = vsel %vm1284, %v1270, %v1108
        %v1288 = vsel %vm1284, %v1271, %v1110
        %v1289 = vsel %vm1284, %v1272, %v1112
        %v1290 = vsel %vm1284, %v1273, %v1114
        %v1291 = vsel %vm1284, %v1274, %v1116
        %v1292 = vsel %vm1284, %v1275, %v1118
        %v1293 = vsel %vm1284, %v1276, %v1120
        %v1294 = vsel %vm1284, %v1277, %v1122
        %v1295 = vsel %vm1284, %v1278, %v1124
        %v1296 = vsel %vm1284, %v1279, %v1126
        %v1297 = vsel %vm1284, %v1280, %v1128
        %v1298 = vsel %vm1284, %v1281, %v1130
        %v1299 = vsel %vm1284, %v1282, %v1132
        %v1300 = vsel %vm1284, %v1283, %v1134
        %vm1301 = vcmask 457728
        %v1302 = vsel %vm1301, %v1285, %v1152
        %v1303 = vsel %vm1301, %v1286, %v1154
        %v1304 = vsel %vm1301, %v1287, %v1156
        %v1305 = vsel %vm1301, %v1288, %v1158
        %v1306 = vsel %vm1301, %v1289, %v1160
        %v1307 = vsel %vm1301, %v1290, %v1162
        %v1308 = vsel %vm1301, %v1291, %v1164
        %v1309 = vsel %vm1301, %v1292, %v1166
        %v1310 = vsel %vm1301, %v1293, %v1168
        %v1311 = vsel %vm1301, %v1294, %v1170
        %v1312 = vsel %vm1301, %v1295, %v1172
        %v1313 = vsel %vm1301, %v1296, %v1174
        %v1314 = vsel %vm1301, %v1297, %v1176
        %v1315 = vsel %vm1301, %v1298, %v1178
        %v1316 = vsel %vm1301, %v1299, %v1180
        %v1317 = vsel %vm1301, %v1300, %v1182
        %v1318 = vld [vmem:[%s7] sm:$0xff]
        %v1319 = vld [vmem:[%s7 + $0x8] sm:$0xff]
        %v1320 = vld [vmem:[%s7 + $0x10] sm:$0xff]
        %v1321 = vld [vmem:[%s7 + $0x18] sm:$0xff]
        %v1322 = vld [vmem:[%s7 + $0x20] sm:$0xff]
        %v1323 = vld [vmem:[%s7 + $0x28] sm:$0xff]
        %v1324 = vld [vmem:[%s7 + $0x30] sm:$0xff]
        %v1325 = vld [vmem:[%s7 + $0x38] sm:$0xff]
        %v1326 = vld [vmem:[%s7 + $0x40] sm:$0xff]
        %v1327 = vld [vmem:[%s7 + $0x48] sm:$0xff]
        %v1328 = vld [vmem:[%s7 + $0x50] sm:$0xff]
        %v1329 = vld [vmem:[%s7 + $0x58] sm:$0xff]
        %v1330 = vld [vmem:[%s7 + $0x60] sm:$0xff]
        %v1331 = vld [vmem:[%s7 + $0x68] sm:$0xff]
        %v1332 = vld [vmem:[%s7 + $0x70] sm:$0xff]
        %v1333 = vld [vmem:[%s7 + $0x78] sm:$0xff]
        %v1334 = vmul.f32 %v1302, %v1318
        %v1335 = vmul.f32 %v1303, %v1319
        %v1336 = vmul.f32 %v1304, %v1320
        %v1337 = vmul.f32 %v1305, %v1321
        %v1338 = vmul.f32 %v1306, %v1322
        %v1339 = vmul.f32 %v1307, %v1323
        %v1340 = vmul.f32 %v1308, %v1324
        %v1341 = vmul.f32 %v1309, %v1325
        %v1342 = vmul.f32 %v1310, %v1326
        %v1343 = vmul.f32 %v1311, %v1327
        %v1344 = vmul.f32 %v1312, %v1328
        %v1345 = vmul.f32 %v1313, %v1329
        %v1346 = vmul.f32 %v1314, %v1330
        %v1347 = vmul.f32 %v1315, %v1331
        %v1348 = vmul.f32 %v1316, %v1332
        %v1349 = vmul.f32 %v1317, %v1333
        %1350 = vmatprep.subr.mxu0 0.0
        %1351 = vmatpush1.msra.mxu0 %v1334
        %1352 = vmatprep.subr.mxu0 0.0
        %1353 = vmatpush1.msra.mxu0 %v1335
        %1354 = vmatprep.subr.mxu0 0.0
        %1355 = vmatpush1.msra.mxu0 %v1336
        %1356 = vmatprep.subr.mxu0 0.0
        %1357 = vmatpush1.msra.mxu0 %v1337
        %1358 = vmatprep.subr.mxu0 0.0
        %1359 = vmatpush1.msra.mxu0 %v1338
        %1360 = vmatprep.subr.mxu0 0.0
        %1361 = vmatpush1.msra.mxu0 %v1339
        %1362 = vmatprep.subr.mxu0 0.0
        %1363 = vmatpush1.msra.mxu0 %v1340
        %1364 = vmatprep.subr.mxu0 0.0
        %1365 = vmatpush1.msra.mxu0 %v1341
        %1366 = vmatprep.subr.mxu0 0.0
        %1367 = vmatpush1.msra.mxu0 %v1342
        %1368 = vmatprep.subr.mxu0 0.0
        %1369 = vmatpush1.msra.mxu0 %v1343
        %1370 = vmatprep.subr.mxu0 0.0
        %1371 = vmatpush1.msra.mxu0 %v1344
        %1372 = vmatprep.subr.mxu0 0.0
        %1373 = vmatpush1.msra.mxu0 %v1345
        %1374 = vmatprep.subr.mxu0 0.0
        %1375 = vmatpush1.msra.mxu0 %v1346
        %1376 = vmatprep.subr.mxu0 0.0
        %1377 = vmatpush1.msra.mxu0 %v1347
        %1378 = vmatprep.subr.mxu0 0.0
        %1379 = vmatpush1.msra.mxu0 %v1348
        %1380 = vmatprep.subr.mxu0 0.0
        %1381 = vmatpush1.msra.mxu0 %v1349
        %1382 = vmatprep.subr.mxu0 0.0
        %1383 = vmatpush1.msra.mxu0 0.0
        %1384 = vmatprep.subr.mxu0 0.0
        %1385 = vmatpush1.msra.mxu0 0.0
        %1386 = vmatprep.subr.mxu0 0.0
        %1387 = vmatpush1.msra.mxu0 0.0
        %1388 = vmatprep.subr.mxu0 0.0
        %1389 = vmatpush1.msra.mxu0 0.0
        %1390 = vmatprep.subr.mxu0 0.0
        %1391 = vmatpush1.msra.mxu0 0.0
        %1392 = vmatprep.subr.mxu0 0.0
        %1393 = vmatpush1.msra.mxu0 0.0
        %1394 = vmatprep.subr.mxu0 0.0
        %1395 = vmatpush1.msra.mxu0 0.0
        %1396 = vmatprep.subr.mxu0 0.0
        %1397 = vmatpush1.msra.mxu0 0.0
        %1398 = vmatprep.subr.mxu0 0.0
        %1399 = vmatpush1.msra.mxu0 0.0
        %1400 = vmatprep.subr.mxu0 0.0
        %1401 = vmatpush1.msra.mxu0 0.0
        %1402 = vmatprep.subr.mxu0 0.0
        %1403 = vmatpush1.msra.mxu0 0.0
        %1404 = vmatprep.subr.mxu0 0.0
        %1405 = vmatpush1.msra.mxu0 0.0
        %1406 = vmatprep.subr.mxu0 0.0
        %1407 = vmatpush1.msra.mxu0 0.0
        %1408 = vmatprep.subr.mxu0 0.0
        %1409 = vmatpush1.msra.mxu0 0.0
        %1410 = vmatprep.subr.mxu0 0.0
        %1411 = vmatpush1.msra.mxu0 0.0
        %1412 = vmatprep.subr.mxu0 0.0
        %1413 = vmatpush1.msra.mxu0 0.0
        %1414 = vmatprep.mubr.f32.mxu0 0.0
        %1415 = vmatmul.mubr.f32.gmra.mrb[0].mxu0 %v814
        %v1416 = vpop.f32.mrb[0].mxu0
        %v1417 = vadd.f32 0.0, %v1416
        %v1418 = vpop.f32.mrb[0].mxu0
        %1419 = vdwg.mxu0
        %v1420 = vsel %vm669, %v1417, -inf
        %1421 = vmax.xlane.f32.xlu0 %v1420
        %v1422 = vpop.xlane.xlu0 %1421
        %v1423 = vsub.f32 %v1417, %v1422
        %v1424 = vmul.f32 %v1423, 1.442695
        %v1425 = vpow.pop %v1424
        %v1426 = vld [vmem:[#allocation7] sm:$0xff]
        %v1427 = vld [vmem:[#allocation7 + $0x8] sm:$0xff]
        %v1428 = vld [vmem:[#allocation7 + $0x10] sm:$0xff]
        %v1429 = vld [vmem:[#allocation7 + $0x18] sm:$0xff]
        %v1430 = vld [vmem:[#allocation7 + $0x20] sm:$0xff]
        %v1431 = vld [vmem:[#allocation7 + $0x28] sm:$0xff]
        %v1432 = vld [vmem:[#allocation7 + $0x30] sm:$0xff]
        %v1433 = vld [vmem:[#allocation7 + $0x38] sm:$0xff]
        %v1434 = vmul.f32 %v811, %v1426
        %v1435 = vmul.f32 %v811, %v1427
        %v1436 = vmul.f32 %v811, %v1428
        %v1437 = vmul.f32 %v811, %v1429
        %v1438 = vmul.f32 %v811, %v1430
        %v1439 = vmul.f32 %v811, %v1431
        %v1440 = vmul.f32 %v811, %v1432
        %v1441 = vmul.f32 %v811, %v1433
        %v1443 = vsel %vm669, %v1425, 0
        %1445 = vmatprep.subr.mxu0 %v1426
        %1446 = vmatpush1.msra.mxu0 %v1434
        %1447 = vmatprep.subr.mxu0 %v1427
        %1448 = vmatpush1.msra.mxu0 %v1435
        %1449 = vmatprep.subr.mxu0 %v1428
        %1450 = vmatpush1.msra.mxu0 %v1436
        %1451 = vmatprep.subr.mxu0 %v1429
        %1452 = vmatpush1.msra.mxu0 %v1437
        %1453 = vmatprep.subr.mxu0 %v1430
        %1454 = vmatpush1.msra.mxu0 %v1438
        %1455 = vmatprep.subr.mxu0 %v1431
        %1456 = vmatpush1.msra.mxu0 %v1439
        %1457 = vmatprep.subr.mxu0 %v1432
        %1458 = vmatpush1.msra.mxu0 %v1440
        %1459 = vmatprep.subr.mxu0 %v1433
        %1460 = vmatpush1.msra.mxu0 %v1441
        %1461 = vmatprep.subr.mxu0 0.0
        %1462 = vmatpush1.msra.mxu0 0.0
        %1463 = vmatprep.subr.mxu0 0.0
        %1464 = vmatpush1.msra.mxu0 0.0
        %1465 = vmatprep.subr.mxu0 0.0
        %1466 = vmatpush1.msra.mxu0 0.0
        %1467 = vmatprep.subr.mxu0 0.0
        %1468 = vmatpush1.msra.mxu0 0.0
        %1469 = vmatprep.subr.mxu0 0.0
        %1470 = vmatpush1.msra.mxu0 0.0
        %1471 = vmatprep.subr.mxu0 0.0
        %1472 = vmatpush1.msra.mxu0 0.0
        %1473 = vmatprep.subr.mxu0 0.0
        %1474 = vmatpush1.msra.mxu0 0.0
        %1475 = vmatprep.subr.mxu0 0.0
        %1476 = vmatpush1.msra.mxu0 0.0
        %1477 = vmatprep.subr.mxu0 0.0
        %1478 = vmatpush1.msra.mxu0 0.0
        %1479 = vmatprep.subr.mxu0 0.0
        %1480 = vmatpush1.msra.mxu0 0.0
        %1481 = vmatprep.subr.mxu0 0.0
        %1482 = vmatpush1.msra.mxu0 0.0
        %1483 = vmatprep.subr.mxu0 0.0
        %1484 = vmatpush1.msra.mxu0 0.0
        %1485 = vmatprep.subr.mxu0 0.0
        %1486 = vmatpush1.msra.mxu0 0.0
        %1487 = vmatprep.subr.mxu0 0.0
        %1488 = vmatpush1.msra.mxu0 0.0
        %1489 = vmatprep.subr.mxu0 0.0
        %1490 = vmatpush1.msra.mxu0 0.0
        %1491 = vmatprep.subr.mxu0 0.0
        %1492 = vmatpush1.msra.mxu0 0.0
        %1493 = vmatprep.subr.mxu0 0.0
        %1494 = vmatpush1.msra.mxu0 0.0
        %1495 = vmatprep.subr.mxu0 0.0
        %1496 = vmatpush1.msra.mxu0 0.0
        %1497 = vmatprep.subr.mxu0 0.0
        %1498 = vmatpush1.msra.mxu0 0.0
        %1499 = vmatprep.subr.mxu0 0.0
        %1500 = vmatpush1.msra.mxu0 0.0
        %1501 = vmatprep.subr.mxu0 0.0
        %1502 = vmatpush1.msra.mxu0 0.0
        %1503 = vmatprep.subr.mxu0 0.0
        %1504 = vmatpush1.msra.mxu0 0.0
        %1505 = vmatprep.subr.mxu0 0.0
        %1506 = vmatpush1.msra.mxu0 0.0
        %1507 = vmatprep.subr.mxu0 0.0
        %1508 = vmatpush1.msra.mxu0 0.0
        %1509 = vmatprep.mubr.f32.mxu0 0.0
        %1510 = vmatmul.mubr.f32.gmra.mrb[0].mxu0 %v1443
        %v1511 = vpop.f32.mrb[0].mxu0
        %v1512 = vadd.f32 0.0, %v1511
        %v1513 = vpop.f32.mrb[0].mxu0
        %v1514 = vadd.f32 0.0, %v1513
        %1515 = vdwg.mxu0
        %v1516 = vmax.f32 %v1514, 1e-30
        %v1517 = vrcp.pop %v1516
        %v1518 = vmul.f32 %v1512, %v1517
        %v1519 = vld [vmem:[#allocation2] sm:$0xff]
        %v1520 = vld [vmem:[#allocation2 + $0x8] sm:$0xff]
        %v1521 = vld [vmem:[#allocation2 + $0x10] sm:$0xff]
        %v1522 = vld [vmem:[#allocation2 + $0x18] sm:$0xff]
        %v1523 = vld [vmem:[#allocation2 + $0x20] sm:$0xff]
        %v1524 = vld [vmem:[#allocation2 + $0x28] sm:$0xff]
        %v1525 = vld [vmem:[#allocation2 + $0x30] sm:$0xff]
        %v1526 = vld [vmem:[#allocation2 + $0x38] sm:$0xff]
        %v1527 = vld [vmem:[#allocation2 + $0x40] sm:$0xff]
        %v1528 = vld [vmem:[#allocation2 + $0x48] sm:$0xff]
        %v1529 = vld [vmem:[#allocation2 + $0x50] sm:$0xff]
        %v1530 = vld [vmem:[#allocation2 + $0x58] sm:$0xff]
        %v1531 = vld [vmem:[#allocation2 + $0x60] sm:$0xff]
        %v1532 = vld [vmem:[#allocation2 + $0x68] sm:$0xff]
        %v1533 = vld [vmem:[#allocation2 + $0x70] sm:$0xff]
        %v1534 = vld [vmem:[#allocation2 + $0x78] sm:$0xff]
        %v1535 = vld [vmem:[%s6 + $0x3] ss:$0 sm:$0xff]
        %1536 = vmatprep.subr.mxu0 0.0
        %1537 = vmatpush1.msra.mxu0 %v1519
        %1538 = vmatprep.subr.mxu0 0.0
        %1539 = vmatpush1.msra.mxu0 %v1520
        %1540 = vmatprep.subr.mxu0 0.0
        %1541 = vmatpush1.msra.mxu0 %v1521
        %1542 = vmatprep.subr.mxu0 0.0
        %1543 = vmatpush1.msra.mxu0 %v1522
        %1544 = vmatprep.subr.mxu0 0.0
        %1545 = vmatpush1.msra.mxu0 %v1523
        %1546 = vmatprep.subr.mxu0 0.0
        %1547 = vmatpush1.msra.mxu0 %v1524
        %1548 = vmatprep.subr.mxu0 0.0
        %1549 = vmatpush1.msra.mxu0 %v1525
        %1550 = vmatprep.subr.mxu0 0.0
        %1551 = vmatpush1.msra.mxu0 %v1526
        %1552 = vmatprep.subr.mxu0 0.0
        %1553 = vmatpush1.msra.mxu0 %v1527
        %1554 = vmatprep.subr.mxu0 0.0
        %1555 = vmatpush1.msra.mxu0 %v1528
        %1556 = vmatprep.subr.mxu0 0.0
        %1557 = vmatpush1.msra.mxu0 %v1529
        %1558 = vmatprep.subr.mxu0 0.0
        %1559 = vmatpush1.msra.mxu0 %v1530
        %1560 = vmatprep.subr.mxu0 0.0
        %1561 = vmatpush1.msra.mxu0 %v1531
        %1562 = vmatprep.subr.mxu0 0.0
        %1563 = vmatpush1.msra.mxu0 %v1532
        %1564 = vmatprep.subr.mxu0 0.0
        %1565 = vmatpush1.msra.mxu0 %v1533
        %1566 = vmatprep.subr.mxu0 0.0
        %1567 = vmatpush1.msra.mxu0 %v1534
        %1568 = vmatprep.subr.mxu0 0.0
        %1569 = vmatpush1.msra.mxu0 0.0
        %1570 = vmatprep.subr.mxu0 0.0
        %1571 = vmatpush1.msra.mxu0 0.0
        %1572 = vmatprep.subr.mxu0 0.0
        %1573 = vmatpush1.msra.mxu0 0.0
        %1574 = vmatprep.subr.mxu0 0.0
        %1575 = vmatpush1.msra.mxu0 0.0
        %1576 = vmatprep.subr.mxu0 0.0
        %1577 = vmatpush1.msra.mxu0 0.0
        %1578 = vmatprep.subr.mxu0 0.0
        %1579 = vmatpush1.msra.mxu0 0.0
        %1580 = vmatprep.subr.mxu0 0.0
        %1581 = vmatpush1.msra.mxu0 0.0
        %1582 = vmatprep.subr.mxu0 0.0
        %1583 = vmatpush1.msra.mxu0 0.0
        %1584 = vmatprep.subr.mxu0 0.0
        %1585 = vmatpush1.msra.mxu0 0.0
        %1586 = vmatprep.subr.mxu0 0.0
        %1587 = vmatpush1.msra.mxu0 0.0
        %1588 = vmatprep.subr.mxu0 0.0
        %1589 = vmatpush1.msra.mxu0 0.0
        %1590 = vmatprep.subr.mxu0 0.0
        %1591 = vmatpush1.msra.mxu0 0.0
        %1592 = vmatprep.subr.mxu0 0.0
        %1593 = vmatpush1.msra.mxu0 0.0
        %1594 = vmatprep.subr.mxu0 0.0
        %1595 = vmatpush1.msra.mxu0 0.0
        %1596 = vmatprep.subr.mxu0 0.0
        %1597 = vmatpush1.msra.mxu0 0.0
        %1598 = vmatprep.subr.mxu0 0.0
        %1599 = vmatpush1.msra.mxu0 0.0
        %1600 = vmatprep.mubr.f32.mxu0 0.0
        %1601 = vmatmul.mubr.f32.gmra.mrb[0].mxu0 %v1518
        %v1602 = vpop.f32.mrb[0].mxu0
        %v1603 = vadd.f32 %v1535, %v1602
        %v1604 = vpop.f32.mrb[0].mxu0
        %1605 = vdwg.mxu0
        %v1606 = vadd.f32 %v1603, %v460
        %v1607 = vld [vmem:[#allocation5] sm:$0xff]
        %v1608 = vld [vmem:[#allocation5 + $0x8] sm:$0xff]
        %v1609 = vld [vmem:[#allocation5 + $0x10] sm:$0xff]
        %v1610 = vld [vmem:[#allocation5 + $0x18] sm:$0xff]
        %v1611 = vld [vmem:[#allocation5 + $0x20] sm:$0xff]
        %v1612 = vld [vmem:[#allocation5 + $0x28] sm:$0xff]
        %v1613 = vld [vmem:[#allocation5 + $0x30] sm:$0xff]
        %v1614 = vld [vmem:[#allocation5 + $0x38] sm:$0xff]
        %v1615 = vld [vmem:[#allocation5 + $0x40] sm:$0xff]
        %v1616 = vld [vmem:[#allocation5 + $0x48] sm:$0xff]
        %v1617 = vld [vmem:[#allocation5 + $0x50] sm:$0xff]
        %v1618 = vld [vmem:[#allocation5 + $0x58] sm:$0xff]
        %v1619 = vld [vmem:[#allocation5 + $0x60] sm:$0xff]
        %v1620 = vld [vmem:[#allocation5 + $0x68] sm:$0xff]
        %v1621 = vld [vmem:[#allocation5 + $0x70] sm:$0xff]
        %v1622 = vld [vmem:[#allocation5 + $0x78] sm:$0xff]
        %v1623 = vld [vmem:[%s6 + $0x4] ss:$0 sm:$0xff]
        %1624 = vmatprep.subr.mxu0 0.0
        %1625 = vmatpush1.msra.mxu0 %v1607
        %1626 = vmatprep.subr.mxu0 0.0
        %1627 = vmatpush1.msra.mxu0 %v1608
        %1628 = vmatprep.subr.mxu0 0.0
        %1629 = vmatpush1.msra.mxu0 %v1609
        %1630 = vmatprep.subr.mxu0 0.0
        %1631 = vmatpush1.msra.mxu0 %v1610
        %1632 = vmatprep.subr.mxu0 0.0
        %1633 = vmatpush1.msra.mxu0 %v1611
        %1634 = vmatprep.subr.mxu0 0.0
        %1635 = vmatpush1.msra.mxu0 %v1612
        %1636 = vmatprep.subr.mxu0 0.0
        %1637 = vmatpush1.msra.mxu0 %v1613
        %1638 = vmatprep.subr.mxu0 0.0
        %1639 = vmatpush1.msra.mxu0 %v1614
        %1640 = vmatprep.subr.mxu0 0.0
        %1641 = vmatpush1.msra.mxu0 %v1615
        %1642 = vmatprep.subr.mxu0 0.0
        %1643 = vmatpush1.msra.mxu0 %v1616
        %1644 = vmatprep.subr.mxu0 0.0
        %1645 = vmatpush1.msra.mxu0 %v1617
        %1646 = vmatprep.subr.mxu0 0.0
        %1647 = vmatpush1.msra.mxu0 %v1618
        %1648 = vmatprep.subr.mxu0 0.0
        %1649 = vmatpush1.msra.mxu0 %v1619
        %1650 = vmatprep.subr.mxu0 0.0
        %1651 = vmatpush1.msra.mxu0 %v1620
        %1652 = vmatprep.subr.mxu0 0.0
        %1653 = vmatpush1.msra.mxu0 %v1621
        %1654 = vmatprep.subr.mxu0 0.0
        %1655 = vmatpush1.msra.mxu0 %v1622
        %1656 = vmatprep.subr.mxu0 0.0
        %1657 = vmatpush1.msra.mxu0 0.0
        %1658 = vmatprep.subr.mxu0 0.0
        %1659 = vmatpush1.msra.mxu0 0.0
        %1660 = vmatprep.subr.mxu0 0.0
        %1661 = vmatpush1.msra.mxu0 0.0
        %1662 = vmatprep.subr.mxu0 0.0
        %1663 = vmatpush1.msra.mxu0 0.0
        %1664 = vmatprep.subr.mxu0 0.0
        %1665 = vmatpush1.msra.mxu0 0.0
        %1666 = vmatprep.subr.mxu0 0.0
        %1667 = vmatpush1.msra.mxu0 0.0
        %1668 = vmatprep.subr.mxu0 0.0
        %1669 = vmatpush1.msra.mxu0 0.0
        %1670 = vmatprep.subr.mxu0 0.0
        %1671 = vmatpush1.msra.mxu0 0.0
        %1672 = vmatprep.subr.mxu0 0.0
        %1673 = vmatpush1.msra.mxu0 0.0
        %1674 = vmatprep.subr.mxu0 0.0
        %1675 = vmatpush1.msra.mxu0 0.0
        %1676 = vmatprep.subr.mxu0 0.0
        %1677 = vmatpush1.msra.mxu0 0.0
        %1678 = vmatprep.subr.mxu0 0.0
        %1679 = vmatpush1.msra.mxu0 0.0
        %1680 = vmatprep.subr.mxu0 0.0
        %1681 = vmatpush1.msra.mxu0 0.0
        %1682 = vmatprep.subr.mxu0 0.0
        %1683 = vmatpush1.msra.mxu0 0.0
        %1684 = vmatprep.subr.mxu0 0.0
        %1685 = vmatpush1.msra.mxu0 0.0
        %1686 = vmatprep.subr.mxu0 0.0
        %1687 = vmatpush1.msra.mxu0 0.0
        %1688 = vmatprep.mubr.f32.mxu0 0.0
        %1689 = vmatmul.mubr.f32.gmra.mrb[0].mxu0 %v1606
        %v1690 = vpop.f32.mrb[0].mxu0
        %v1691 = vadd.f32 %v1623, %v1690
        %v1692 = vpop.f32.mrb[0].mxu0
        %1693 = vdwg.mxu0
        %1694 = vst [vmem:[%s367] sm:$0xff] %v1691
        %s1695 = sand.u32 %s227, 1
        %s1696 = scalar_lea.sflag [#allocation4], %s1695
        %s1697 = sand.u32 %s227, 1
        %s1698 = smul.addr %s1697, 8
        %s1699 = scalar_lea.vmem [#allocation8], %s1698
        // Predicated region
        $region69: #{cmfa_forward.1} parent=55 // pred_check
          %p1700 = pneg %p237
        $region70: #{cmfa_forward.1} parent=55 // pred_check_branch
          %1702 = sbr.rel (%p1700) target = $region72
        $region71: #{cmfa_forward.1} parent=55 // pred_region
          %s1704 = ssub.s32 128, 128
          %1705 = vsyncadd %s1696, %s1704
          %s1706 = smul.addr %s25, 128
          %s1707 = scalar_lea.hbm %s9, %s1706
          %s1709 = sshll.u32 %s1699, 4
          %s1710 = int_to_ptr.vmem [resolvable:$true] %s1709
          %1712 = dma.vmem_to_hbm [thread:$0]  %s1710, 128, %s1707, %s1696
        $region72: #{cmfa_forward.1} parent=55 // pred_fallthru
          _
      $region56: #{cmfa_forward.1} parent=5 // pred_fallthru
        _
      %p1713 = scmp.le.s32.totalorder 2, %s20
      // Predicated region
      $region73: #{cmfa_forward.1} parent=5 // pred_check
        %p1714 = pneg %p1713
      $region74: #{cmfa_forward.1} parent=5 // pred_check_branch
        %1716 = sbr.rel (%p1714) target = $region76
      $region75: #{cmfa_forward.1} parent=5 // pred_region
        %s1717 = ssub.s32 %s20, 2
        // Predicated region
        $region77: #{cmfa_forward.1} parent=75 // pred_check
          %p1718 = pneg %p243
        $region78: #{cmfa_forward.1} parent=75 // pred_check_branch
          %1720 = sbr.rel (%p1718) target = $region80
        $region79: #{cmfa_forward.1} parent=75 // pred_region
          %s1721 = sand.u32 %s228, 1
          %s1722 = scalar_lea.sflag [#allocation4], %s1721
          %s1723 = sand.u32 %s228, 1
          %s1724 = smul.addr %s1723, 8
          %s1725 = scalar_lea.vmem [#allocation8], %s1724
          %1726 = dma.done %s1722, 128
        $region80: #{cmfa_forward.1} parent=75 // pred_fallthru
          _
      $region76: #{cmfa_forward.1} parent=5 // pred_fallthru
        _
    $region6: #{cmfa_forward.1} parent=1 // loop_footer
      %s24 = sadd.s32 1, %s20
    $region7: #{cmfa_forward.1} parent=1 // loop_footer_branch
      %19 = sbr.rel target = $region3
    $region8: #{cmfa_forward.1} parent=1 // loop_exit
      _
    %1727 = vsyncpa [#allocation3], 1
    %s1728 = scalar_lea.sflag [#allocation3], 1
    %1729 = vsyncpa %s1728, 1
    %1730 = vsyncpa [#allocation6], 1
    %1731 = vsyncpa [#allocation4], 1
    %s1732 = scalar_lea.sflag [#allocation4], 1
    %1733 = vsyncpa %s1732, 1

</llo_original>
